<compile_context>
chip_gen: v7x
topology: tpu7x:2x2x1
jax: 0.10.0
libtpu: 0.0.40
codegen_flags: <defaults>
</compile_context>

<pallas_src>
import jax
import jax.numpy as jnp
import numpy as np
from jax.experimental import pallas as pl
from jax.experimental.pallas import tpu as pltpu


_BT = 128  # max images per grid step (multiple of 8)


def _round_up(n, m):
    return ((n + m - 1) // m) * m


# ---------------------------------------------------------------------------
# Wrapper-side constant builders (run once per call; weight-dependent ones use
# jnp so they also work under jit).
# ---------------------------------------------------------------------------
def _conv1_as_matmul(w1):
    """(3,1,5,5) OIHW -> T1 (160, 84) with conv1(rows) == X1 @ T1.

    X1 columns: (di, c) = di*32 + c   (c = padded-image column 0..31)
    T1 columns: (co, j) = co*28 + j   (j = output column 0..27)
    T1[di*32 + (j+dj), co*28 + j] = w1[co, 0, di, dj].
    """
    w1r = w1[:, 0]                                             # (3, 5, 5)
    co, di, dj, j = np.meshgrid(np.arange(3), np.arange(5), np.arange(5),
                                np.arange(28), indexing="ij")
    rows = (di * 32 + j + dj).ravel()
    cols = (co * 28 + j).ravel()
    vals = w1r[co.ravel(), di.ravel(), dj.ravel()]
    return jnp.zeros((160, 84), jnp.float32).at[rows, cols].set(vals)


def _conv2_as_matmul_poolfolded(w2):
    """(14,3,5,5) OIHW -> T2' (420, 140).

    The 2x2 average pooling between conv1 and conv2 is folded in: the kernel
    feeds un-scaled row-sums (columns NOT col-pooled), so every weight carries
    a factor 0.25 (0.5 row pool * 0.5 column pool).
    x2 columns : (di, ci, j) = di*84 + ci*28 + j   (j = un-pooled column 0..27)
    T2' columns: (co, oj)    = co*10 + oj
    T2'[di*84 + ci*28 + 2*(oj+dj) + par, co*10 + oj] = 0.25 * w2[co, ci, di, dj].
    """
    co, ci, di, dj, oj, par = np.meshgrid(
        np.arange(14), np.arange(3), np.arange(5), np.arange(5),
        np.arange(10), np.arange(2), indexing="ij")
    rows = (di * 84 + ci * 28 + 2 * (oj + dj) + par).ravel()
    cols = (co * 10 + oj).ravel()
    vals = 0.25 * w2[co.ravel(), ci.ravel(), di.ravel(), dj.ravel()]
    return jnp.zeros((420, 140), jnp.float32).at[rows, cols].set(vals)


def _fc1_poolfolded(fc1_w):
    """(350,120) fc1 (torch .view order (co, pi2, pj2)) -> (700, 120) acting on
    the kernel's un-col-pooled, row-summed conv2 features laid out
    (po, co, oj) = po*140 + co*10 + oj; folds the 0.25 pool2 scale."""
    po, co, oj = np.meshgrid(np.arange(5), np.arange(14), np.arange(10),
                             indexing="ij")
    src = (co * 25 + po * 5 + oj // 2).ravel()   # flat order = po*140+co*10+oj
    return 0.25 * fc1_w[src, :]


# ---------------------------------------------------------------------------
# Fused kernel: one grid step = one block of `bt` images.
# ---------------------------------------------------------------------------
def _make_fused_kernel(bt):
    def kernel(xs_ref, t1_ref, b1_ref, t2_ref, b2_ref,
               w1_ref, c1_ref, w2_ref, c2_ref, w3_ref, c3_ref, o_ref):
        f32 = jnp.float32

        xs = xs_ref[...]                                      # (32*bt, 32) f32
        t1 = t1_ref[...]
        b1 = b1_ref[...]

        # conv1 im2row: slab rows are ordered (r%2, r//2, b), so for output-row
        # parity p and vertical tap di the needed rows are one aligned slice.
        def conv1_rows(p):
            parts = []
            for di in range(5):
                c = p + di
                start = ((c % 2) * 16 + c // 2) * bt
                parts.append(xs[start:start + 14 * bt, :])
            return jnp.concatenate(parts, axis=1)             # (14*bt, 160)

        out1e = jnp.tanh(jnp.dot(conv1_rows(0), t1,
                                 preferred_element_type=f32) + b1)
        out1o = jnp.tanh(jnp.dot(conv1_rows(1), t1,
                                 preferred_element_type=f32) + b1)
        # 2x2 avg-pool, row direction: plain VPU add (0.5 folded into T2').
        s1 = out1e + out1o                                    # (14*bt, 84)

        # conv2 im2row (5 aligned slices, lane concat) + one matmul;
        # column pooling of pool1 is folded into T2'.
        x2 = jnp.concatenate([s1[di * bt:(di + 10) * bt, :] for di in range(5)],
                             axis=1)                          # (10*bt, 420)
        out2 = jnp.tanh(jnp.dot(x2, t2_ref[...], preferred_element_type=f32)
                        + b2_ref[...])                        # (10*bt, 140)

        # pool2 (row direction) + flatten: paired aligned VPU adds, lane
        # concat; column pooling + 0.25 scale folded into fc1'.
        feat = jnp.concatenate(
            [out2[(2 * po) * bt:(2 * po + 1) * bt, :]
             + out2[(2 * po + 1) * bt:(2 * po + 2) * bt, :] for po in range(5)],
            axis=1)                                           # (bt, 700)

        # fc1 -> tanh -> fc2 -> tanh -> fc3 -> softmax(dim=1)
        h = jnp.tanh(jnp.dot(feat, w1_ref[...], preferred_element_type=f32)
                     + c1_ref[...])
        h = jnp.tanh(jnp.dot(h, w2_ref[...], preferred_element_type=f32)
                     + c2_ref[...])
        z = jnp.dot(h, w3_ref[...], preferred_element_type=f32) + c3_ref[...]
        z = z - jnp.max(z, axis=1, keepdims=True)
        e = jnp.exp(z)
        s = jnp.sum(e, axis=1, keepdims=True)
        inv = pl.reciprocal(s, approx=True)
        inv = inv * (2.0 - s * inv)        # one Newton step -> ~f32 accurate
        o_ref[...] = e * inv

    return kernel


# ---------------------------------------------------------------------------
# Forward pass wrapper.
# ---------------------------------------------------------------------------
def first_custom_nn_forward(x, params, *, block_b=_BT):
    """x: (B, 1, 28, 28) float32 (NCHW, like the PyTorch module)."""
    B = x.shape[0]
    b8 = _round_up(B, 8)
    # bt: multiple of 8, capped at block_b, and chosen so the grid keeps >= 2
    # steps when the batch allows it (v7x has 2 TensorCores).
    bt = max(8, min(_round_up(block_b, 8), _round_up((b8 + 1) // 2, 8), b8))
    G = pl.cdiv(B, bt)
    Bpad = G * bt

    # pad batch + conv1's padding=2, then build the row-parity-ordered slab:
    # slab row index (within a block) = (r%2)*16*bt + (r//2)*bt + b, r = 0..31.
    x2d = jnp.asarray(x, jnp.float32)[:, 0, :, :]
    xp = jnp.pad(x2d, ((0, Bpad - B), (2, 2), (2, 2)))         # (Bpad, 32, 32)
    xg = xp.reshape(G, bt, 16, 2, 32)                          # (g,b,r//2,r%2,c)
    slab = xg.transpose(0, 3, 2, 1, 4).reshape(G * 32 * bt, 32)

    f32, bf16 = jnp.float32, jnp.bfloat16
    # constant matrices (bf16 storage == f32 storage at default MXU precision)
    T1 = _conv1_as_matmul(jnp.asarray(params["conv1_w"], f32)).astype(bf16)
    T2 = _conv2_as_matmul_poolfolded(
        jnp.asarray(params["conv2_w"], f32)).astype(bf16)
    W1 = _fc1_poolfolded(jnp.asarray(params["fc1_w"], f32)).astype(bf16)
    W2 = jnp.asarray(params["fc2_w"], f32).astype(bf16)
    W3 = jnp.asarray(params["fc3_w"], f32).astype(bf16)

    # biases (defensive reshape: accept (N,) or (1, N)); conv biases expanded
    # along the kernel's column layout
    b1e = jnp.repeat(jnp.asarray(params["conv1_b"], f32).reshape(-1), 28)[None, :]
    b2e = jnp.repeat(jnp.asarray(params["conv2_b"], f32).reshape(-1), 10)[None, :]
    c1 = jnp.asarray(params["fc1_b"], f32).reshape(1, -1)       # (1, 120)
    c2 = jnp.asarray(params["fc2_b"], f32).reshape(1, -1)       # (1, 84)
    c3 = jnp.asarray(params["fc3_b"], f32).reshape(1, -1)       # (1, 10)

    def _const(shape):
        return pl.BlockSpec(shape, lambda g: (0, 0))

    out = pl.pallas_call(
        _make_fused_kernel(bt),
        out_shape=jax.ShapeDtypeStruct((Bpad, 10), jnp.float32),
        grid=(G,),
        in_specs=[
            pl.BlockSpec((32 * bt, 32), lambda g: (g, 0)),      # input slab
            _const((160, 84)),                                  # T1
            _const((1, 84)),                                    # conv1 bias
            _const((420, 140)),                                 # T2' (pool folded)
            _const((1, 140)),                                   # conv2 bias
            _const((700, 120)),                                 # fc1' (pool folded)
            _const((1, 120)),                                   # fc1 bias
            _const((120, 84)),                                  # fc2
            _const((1, 84)),                                    # fc2 bias
            _const((84, 10)),                                   # fc3
            _const((1, 10)),                                    # fc3 bias
        ],
        out_specs=pl.BlockSpec((bt, 10), lambda g: (g, 0)),
        compiler_params=pltpu.CompilerParams(
            dimension_semantics=("parallel",),                  # v7x: 2 TCs
            vmem_limit_bytes=32 * 1024 * 1024),
    )(slab, T1, b1e, T2, b2e, W1, c1, W2, c2, W3, c3)

    return out[:B]


# ---------------------------------------------------------------------------
# Pure-JAX reference of the PyTorch forward (high precision), for verification.
# ---------------------------------------------------------------------------
def reference_forward(x, params):
    with jax.default_matmul_precision("highest"):
        def conv(a, w, b, pad):
            y = jax.lax.conv_general_dilated(
                a, w, (1, 1), ((pad, pad), (pad, pad)),
                dimension_numbers=("NCHW", "OIHW", "NCHW"))
            return y + b.reshape(-1)[None, :, None, None]

        def pool(a):
            B, C, H, W = a.shape
            return a.reshape(B, C, H // 2, 2, W // 2, 2).mean(axis=(3, 5))

        y = pool(jnp.tanh(conv(x, params["conv1_w"], params["conv1_b"], 2)))
        y = pool(jnp.tanh(conv(y, params["conv2_w"], params["conv2_b"], 0)))
        y = y.reshape(x.shape[0], -1)
        y = jnp.tanh(y @ params["fc1_w"] + params["fc1_b"].reshape(-1))
        y = jnp.tanh(y @ params["fc2_w"] + params["fc2_b"].reshape(-1))
        z = y @ params["fc3_w"] + params["fc3_b"].reshape(-1)
        return jax.nn.softmax(z, axis=1)


if __name__ == "__main__":
    key = jax.random.PRNGKey(0)
    keys = jax.random.split(key, 11)

    # Deterministic synthetic parameters (shapes from the module's __init__).
    params = {
        "conv1_w": jax.random.normal(keys[1], (3, 1, 5, 5), jnp.float32) * 0.2,
        "conv1_b": jax.random.normal(keys[2], (3,), jnp.float32) * 0.1,
        "conv2_w": jax.random.normal(keys[3], (14, 3, 5, 5), jnp.float32) * 0.1,
        "conv2_b": jax.random.normal(keys[4], (14,), jnp.float32) * 0.1,
        # Linear weights stored as (in, out) = torch weight.T ; y = x @ W + b.
        "fc1_w": jax.random.normal(keys[5], (350, 120), jnp.float32) * 0.05,
        "fc1_b": jax.random.normal(keys[6], (120,), jnp.float32) * 0.05,
        "fc2_w": jax.random.normal(keys[7], (120, 84), jnp.float32) * 0.05,
        "fc2_b": jax.random.normal(keys[8], (84,), jnp.float32) * 0.05,
        "fc3_w": jax.random.normal(keys[9], (84, 10), jnp.float32) * 0.05,
        "fc3_b": jnp.zeros((10,), jnp.float32),
    }

    # Check 1: batch 2 (single grid step, bt = 8).
    x_small = jax.random.normal(keys[0], (2, 1, 28, 28), jnp.float32)
    out = jax.block_until_ready(first_custom_nn_forward(x_small, params))
    ref = jax.block_until_ready(reference_forward(x_small, params))
    np.testing.assert_allclose(np.asarray(out), np.asarray(ref),
                               rtol=1.5e-3, atol=3e-4)
    np.testing.assert_allclose(np.asarray(out).sum(axis=1),
                               np.ones(2, np.float32), rtol=1e-4, atol=1e-4)

    # Check 2: batch 18, forced bt = 8 -> 3 grid steps and a padded tail.
    x_multi = jax.random.normal(keys[10], (18, 1, 28, 28), jnp.float32)
    out_m = jax.block_until_ready(
        first_custom_nn_forward(x_multi, params, block_b=8))
    ref_m = jax.block_until_ready(reference_forward(x_multi, params))
    np.testing.assert_allclose(np.asarray(out_m), np.asarray(ref_m),
                               rtol=1.5e-3, atol=3e-4)
    assert out.shape == (2, 10) and out_m.shape == (18, 10)

    print("KERNEL_OK")
</pallas_src>

<mosaic_0001>
module attributes {stable_mosaic.version = 11 : i64} {
  func.func @kernel(%arg0: i32, %arg1: memref<256x32xf32, #tpu.memory_space<vmem>>, %arg2: memref<160x84xbf16, #tpu.memory_space<vmem>>, %arg3: memref<1x84xf32, #tpu.memory_space<vmem>>, %arg4: memref<420x140xbf16, #tpu.memory_space<vmem>>, %arg5: memref<1x140xf32, #tpu.memory_space<vmem>>, %arg6: memref<700x120xbf16, #tpu.memory_space<vmem>>, %arg7: memref<1x120xf32, #tpu.memory_space<vmem>>, %arg8: memref<120x84xbf16, #tpu.memory_space<vmem>>, %arg9: memref<1x84xf32, #tpu.memory_space<vmem>>, %arg10: memref<84x10xbf16, #tpu.memory_space<vmem>>, %arg11: memref<1x10xf32, #tpu.memory_space<vmem>>, %arg12: memref<8x10xf32, #tpu.memory_space<vmem>>) attributes {dimension_semantics = [#tpu.dimension_semantics<parallel>], iteration_bounds = array<i64: 1>, scalar_prefetch = 0 : i64, scratch_operands = 0 : i64, tpu.core_type = #tpu.core_type<tc>, window_params = [{transform_indices = @transform_0, window_bounds = array<i64: 256, 32>}, {pipeline_mode = #tpu.pipeline_mode<synchronous>, transform_indices = @transform_1, window_bounds = array<i64: 160, 84>}, {pipeline_mode = #tpu.pipeline_mode<synchronous>, transform_indices = @transform_2, window_bounds = array<i64: 1, 84>}, {pipeline_mode = #tpu.pipeline_mode<synchronous>, transform_indices = @transform_3, window_bounds = array<i64: 420, 140>}, {pipeline_mode = #tpu.pipeline_mode<synchronous>, transform_indices = @transform_4, window_bounds = array<i64: 1, 140>}, {pipeline_mode = #tpu.pipeline_mode<synchronous>, transform_indices = @transform_5, window_bounds = array<i64: 700, 120>}, {pipeline_mode = #tpu.pipeline_mode<synchronous>, transform_indices = @transform_6, window_bounds = array<i64: 1, 120>}, {pipeline_mode = #tpu.pipeline_mode<synchronous>, transform_indices = @transform_7, window_bounds = array<i64: 120, 84>}, {pipeline_mode = #tpu.pipeline_mode<synchronous>, transform_indices = @transform_8, window_bounds = array<i64: 1, 84>}, {pipeline_mode = #tpu.pipeline_mode<synchronous>, transform_indices = @transform_9, window_bounds = array<i64: 84, 10>}, {pipeline_mode = #tpu.pipeline_mode<synchronous>, transform_indices = @transform_10, window_bounds = array<i64: 1, 10>}, {transform_indices = @transform_11, window_bounds = array<i64: 8, 10>}]} {
    %c0 = arith.constant 0 : index
    %c0_0 = arith.constant 0 : index
    %0 = vector.load %arg1[%c0, %c0_0] : memref<256x32xf32, #tpu.memory_space<vmem>>, vector<256x32xf32>
    %c0_1 = arith.constant 0 : index
    %c0_2 = arith.constant 0 : index
    %1 = vector.load %arg2[%c0_1, %c0_2] : memref<160x84xbf16, #tpu.memory_space<vmem>>, vector<160x84xbf16>
    %c0_3 = arith.constant 0 : index
    %c0_4 = arith.constant 0 : index
    %2 = vector.load %arg3[%c0_3, %c0_4] : memref<1x84xf32, #tpu.memory_space<vmem>>, vector<1x84xf32>
    %3 = vector.extract_strided_slice %0 {offsets = [0, 0], sizes = [112, 32], strides = [1, 1]} : vector<256x32xf32> to vector<112x32xf32>
    %4 = vector.extract_strided_slice %0 {offsets = [128, 0], sizes = [112, 32], strides = [1, 1]} : vector<256x32xf32> to vector<112x32xf32>
    %5 = vector.extract_strided_slice %0 {offsets = [8, 0], sizes = [112, 32], strides = [1, 1]} : vector<256x32xf32> to vector<112x32xf32>
    %6 = vector.extract_strided_slice %0 {offsets = [136, 0], sizes = [112, 32], strides = [1, 1]} : vector<256x32xf32> to vector<112x32xf32>
    %7 = vector.extract_strided_slice %0 {offsets = [16, 0], sizes = [112, 32], strides = [1, 1]} : vector<256x32xf32> to vector<112x32xf32>
    %8 = tpu.concatenate %3, %4, %5, %6, %7 in 1 : vector<112x32xf32>, vector<112x32xf32>, vector<112x32xf32>, vector<112x32xf32>, vector<112x32xf32> -> vector<112x160xf32>
    %cst = arith.constant dense<0.000000e+00> : vector<112x84xf32>
    %9 = tpu.matmul %8, %1, %cst {dimension_numbers = #tpu.dot_dimension_numbers<[1], [0], [0], [1], [0, 0, 1, 1], [], []>} : vector<112x160xf32>, vector<160x84xbf16>, vector<112x84xf32> -> vector<112x84xf32>
    %10 = vector.broadcast %2 : vector<1x84xf32> to vector<112x84xf32>
    %11 = arith.addf %9, %10 : vector<112x84xf32>
    %12 = math.tanh %11 : vector<112x84xf32>
    %13 = vector.extract_strided_slice %0 {offsets = [128, 0], sizes = [112, 32], strides = [1, 1]} : vector<256x32xf32> to vector<112x32xf32>
    %14 = vector.extract_strided_slice %0 {offsets = [8, 0], sizes = [112, 32], strides = [1, 1]} : vector<256x32xf32> to vector<112x32xf32>
    %15 = vector.extract_strided_slice %0 {offsets = [136, 0], sizes = [112, 32], strides = [1, 1]} : vector<256x32xf32> to vector<112x32xf32>
    %16 = vector.extract_strided_slice %0 {offsets = [16, 0], sizes = [112, 32], strides = [1, 1]} : vector<256x32xf32> to vector<112x32xf32>
    %17 = vector.extract_strided_slice %0 {offsets = [144, 0], sizes = [112, 32], strides = [1, 1]} : vector<256x32xf32> to vector<112x32xf32>
    %18 = tpu.concatenate %13, %14, %15, %16, %17 in 1 : vector<112x32xf32>, vector<112x32xf32>, vector<112x32xf32>, vector<112x32xf32>, vector<112x32xf32> -> vector<112x160xf32>
    %cst_5 = arith.constant dense<0.000000e+00> : vector<112x84xf32>
    %19 = tpu.matmul %18, %1, %cst_5 {dimension_numbers = #tpu.dot_dimension_numbers<[1], [0], [0], [1], [0, 0, 1, 1], [], []>} : vector<112x160xf32>, vector<160x84xbf16>, vector<112x84xf32> -> vector<112x84xf32>
    %20 = vector.broadcast %2 : vector<1x84xf32> to vector<112x84xf32>
    %21 = arith.addf %19, %20 : vector<112x84xf32>
    %22 = math.tanh %21 : vector<112x84xf32>
    %23 = arith.addf %12, %22 : vector<112x84xf32>
    %24 = vector.extract_strided_slice %23 {offsets = [0, 0], sizes = [80, 84], strides = [1, 1]} : vector<112x84xf32> to vector<80x84xf32>
    %25 = vector.extract_strided_slice %23 {offsets = [8, 0], sizes = [80, 84], strides = [1, 1]} : vector<112x84xf32> to vector<80x84xf32>
    %26 = vector.extract_strided_slice %23 {offsets = [16, 0], sizes = [80, 84], strides = [1, 1]} : vector<112x84xf32> to vector<80x84xf32>
    %27 = vector.extract_strided_slice %23 {offsets = [24, 0], sizes = [80, 84], strides = [1, 1]} : vector<112x84xf32> to vector<80x84xf32>
    %28 = vector.extract_strided_slice %23 {offsets = [32, 0], sizes = [80, 84], strides = [1, 1]} : vector<112x84xf32> to vector<80x84xf32>
    %29 = tpu.concatenate %24, %25, %26, %27, %28 in 1 : vector<80x84xf32>, vector<80x84xf32>, vector<80x84xf32>, vector<80x84xf32>, vector<80x84xf32> -> vector<80x420xf32>
    %c0_6 = arith.constant 0 : index
    %c0_7 = arith.constant 0 : index
    %30 = vector.load %arg4[%c0_6, %c0_7] : memref<420x140xbf16, #tpu.memory_space<vmem>>, vector<420x140xbf16>
    %cst_8 = arith.constant dense<0.000000e+00> : vector<80x140xf32>
    %31 = tpu.matmul %29, %30, %cst_8 {dimension_numbers = #tpu.dot_dimension_numbers<[1], [0], [0], [1], [0, 0, 1, 1], [], []>} : vector<80x420xf32>, vector<420x140xbf16>, vector<80x140xf32> -> vector<80x140xf32>
    %c0_9 = arith.constant 0 : index
    %c0_10 = arith.constant 0 : index
    %32 = vector.load %arg5[%c0_9, %c0_10] : memref<1x140xf32, #tpu.memory_space<vmem>>, vector<1x140xf32>
    %33 = vector.broadcast %32 : vector<1x140xf32> to vector<80x140xf32>
    %34 = arith.addf %31, %33 : vector<80x140xf32>
    %35 = math.tanh %34 : vector<80x140xf32>
    %36 = vector.extract_strided_slice %35 {offsets = [0, 0], sizes = [8, 140], strides = [1, 1]} : vector<80x140xf32> to vector<8x140xf32>
    %37 = vector.extract_strided_slice %35 {offsets = [8, 0], sizes = [8, 140], strides = [1, 1]} : vector<80x140xf32> to vector<8x140xf32>
    %38 = arith.addf %36, %37 : vector<8x140xf32>
    %39 = vector.extract_strided_slice %35 {offsets = [16, 0], sizes = [8, 140], strides = [1, 1]} : vector<80x140xf32> to vector<8x140xf32>
    %40 = vector.extract_strided_slice %35 {offsets = [24, 0], sizes = [8, 140], strides = [1, 1]} : vector<80x140xf32> to vector<8x140xf32>
    %41 = arith.addf %39, %40 : vector<8x140xf32>
    %42 = vector.extract_strided_slice %35 {offsets = [32, 0], sizes = [8, 140], strides = [1, 1]} : vector<80x140xf32> to vector<8x140xf32>
    %43 = vector.extract_strided_slice %35 {offsets = [40, 0], sizes = [8, 140], strides = [1, 1]} : vector<80x140xf32> to vector<8x140xf32>
    %44 = arith.addf %42, %43 : vector<8x140xf32>
    %45 = vector.extract_strided_slice %35 {offsets = [48, 0], sizes = [8, 140], strides = [1, 1]} : vector<80x140xf32> to vector<8x140xf32>
    %46 = vector.extract_strided_slice %35 {offsets = [56, 0], sizes = [8, 140], strides = [1, 1]} : vector<80x140xf32> to vector<8x140xf32>
    %47 = arith.addf %45, %46 : vector<8x140xf32>
    %48 = vector.extract_strided_slice %35 {offsets = [64, 0], sizes = [8, 140], strides = [1, 1]} : vector<80x140xf32> to vector<8x140xf32>
    %49 = vector.extract_strided_slice %35 {offsets = [72, 0], sizes = [8, 140], strides = [1, 1]} : vector<80x140xf32> to vector<8x140xf32>
    %50 = arith.addf %48, %49 : vector<8x140xf32>
    %51 = tpu.concatenate %38, %41, %44, %47, %50 in 1 : vector<8x140xf32>, vector<8x140xf32>, vector<8x140xf32>, vector<8x140xf32>, vector<8x140xf32> -> vector<8x700xf32>
    %c0_11 = arith.constant 0 : index
    %c0_12 = arith.constant 0 : index
    %52 = vector.load %arg6[%c0_11, %c0_12] : memref<700x120xbf16, #tpu.memory_space<vmem>>, vector<700x120xbf16>
    %cst_13 = arith.constant dense<0.000000e+00> : vector<8x120xf32>
    %53 = tpu.matmul %51, %52, %cst_13 {dimension_numbers = #tpu.dot_dimension_numbers<[1], [0], [0], [1], [0, 0, 1, 1], [], []>} : vector<8x700xf32>, vector<700x120xbf16>, vector<8x120xf32> -> vector<8x120xf32>
    %c0_14 = arith.constant 0 : index
    %c0_15 = arith.constant 0 : index
    %54 = vector.load %arg7[%c0_14, %c0_15] : memref<1x120xf32, #tpu.memory_space<vmem>>, vector<1x120xf32>
    %55 = vector.broadcast %54 : vector<1x120xf32> to vector<8x120xf32>
    %56 = arith.addf %53, %55 : vector<8x120xf32>
    %57 = math.tanh %56 : vector<8x120xf32>
    %c0_16 = arith.constant 0 : index
    %c0_17 = arith.constant 0 : index
    %58 = vector.load %arg8[%c0_16, %c0_17] : memref<120x84xbf16, #tpu.memory_space<vmem>>, vector<120x84xbf16>
    %cst_18 = arith.constant dense<0.000000e+00> : vector<8x84xf32>
    %59 = tpu.matmul %57, %58, %cst_18 {dimension_numbers = #tpu.dot_dimension_numbers<[1], [0], [0], [1], [0, 0, 1, 1], [], []>} : vector<8x120xf32>, vector<120x84xbf16>, vector<8x84xf32> -> vector<8x84xf32>
    %c0_19 = arith.constant 0 : index
    %c0_20 = arith.constant 0 : index
    %60 = vector.load %arg9[%c0_19, %c0_20] : memref<1x84xf32, #tpu.memory_space<vmem>>, vector<1x84xf32>
    %61 = vector.broadcast %60 : vector<1x84xf32> to vector<8x84xf32>
    %62 = arith.addf %59, %61 : vector<8x84xf32>
    %63 = math.tanh %62 : vector<8x84xf32>
    %c0_21 = arith.constant 0 : index
    %c0_22 = arith.constant 0 : index
    %64 = vector.load %arg10[%c0_21, %c0_22] : memref<84x10xbf16, #tpu.memory_space<vmem>>, vector<84x10xbf16>
    %cst_23 = arith.constant dense<0.000000e+00> : vector<8x10xf32>
    %65 = tpu.matmul %63, %64, %cst_23 {dimension_numbers = #tpu.dot_dimension_numbers<[1], [0], [0], [1], [0, 0, 1, 1], [], []>} : vector<8x84xf32>, vector<84x10xbf16>, vector<8x10xf32> -> vector<8x10xf32>
    %c0_24 = arith.constant 0 : index
    %c0_25 = arith.constant 0 : index
    %66 = vector.load %arg11[%c0_24, %c0_25] : memref<1x10xf32, #tpu.memory_space<vmem>>, vector<1x10xf32>
    %67 = vector.broadcast %66 : vector<1x10xf32> to vector<8x10xf32>
    %68 = arith.addf %65, %67 : vector<8x10xf32>
    %cst_26 = arith.constant dense<0xFF800000> : vector<8xf32>
    %69 = vector.multi_reduction <maximumf>, %68, %cst_26 [1] : vector<8x10xf32> to vector<8xf32>
    %70 = vector.shape_cast %69 : vector<8xf32> to vector<8x1xf32>
    %71 = vector.broadcast %70 : vector<8x1xf32> to vector<8x10xf32>
    %72 = arith.subf %68, %71 : vector<8x10xf32>
    %73 = math.exp %72 : vector<8x10xf32>
    %cst_27 = arith.constant dense<0.000000e+00> : vector<8xf32>
    %74 = vector.multi_reduction <add>, %73, %cst_27 [1] : vector<8x10xf32> to vector<8xf32>
    %75 = vector.shape_cast %74 : vector<8xf32> to vector<8x1xf32>
    %76 = tpu.reciprocal %75 {approx = true} : vector<8x1xf32> -> vector<8x1xf32>
    %77 = arith.mulf %75, %76 : vector<8x1xf32>
    %cst_28 = arith.constant 2.000000e+00 : f32
    %78 = vector.broadcast %cst_28 : f32 to vector<8x1xf32>
    %79 = arith.subf %78, %77 : vector<8x1xf32>
    %80 = arith.mulf %76, %79 : vector<8x1xf32>
    %81 = vector.broadcast %80 : vector<8x1xf32> to vector<8x10xf32>
    %82 = arith.mulf %73, %81 : vector<8x10xf32>
    %c0_29 = arith.constant 0 : index
    %c0_30 = arith.constant 0 : index
    %83 = vector.load %arg12[%c0_29, %c0_30] : memref<8x10xf32, #tpu.memory_space<vmem>>, vector<8x10xf32>
    tpu.vector_store %arg12[%c0_29, %c0_30], %82 {strides = array<i32>} : memref<8x10xf32, #tpu.memory_space<vmem>>, vector<8x10xf32>,
    return
  }
  func.func @transform_0(%arg0: i32) -> (i32, i32) {
    %c0_i32 = arith.constant 0 : i32
    %c0_i32_0 = arith.constant 0 : i32
    return %arg0, %c0_i32 : i32, i32
  }
  func.func @transform_1(%arg0: i32) -> (i32, i32) {
    %c0_i32 = arith.constant 0 : i32
    %c0_i32_0 = arith.constant 0 : i32
    %c0_i32_1 = arith.constant 0 : i32
    return %c0_i32, %c0_i32_0 : i32, i32
  }
  func.func @transform_2(%arg0: i32) -> (i32, i32) {
    %c0_i32 = arith.constant 0 : i32
    %c0_i32_0 = arith.constant 0 : i32
    %c0_i32_1 = arith.constant 0 : i32
    return %c0_i32, %c0_i32_0 : i32, i32
  }
  func.func @transform_3(%arg0: i32) -> (i32, i32) {
    %c0_i32 = arith.constant 0 : i32
    %c0_i32_0 = arith.constant 0 : i32
    %c0_i32_1 = arith.constant 0 : i32
    return %c0_i32, %c0_i32_0 : i32, i32
  }
  func.func @transform_4(%arg0: i32) -> (i32, i32) {
    %c0_i32 = arith.constant 0 : i32
    %c0_i32_0 = arith.constant 0 : i32
    %c0_i32_1 = arith.constant 0 : i32
    return %c0_i32, %c0_i32_0 : i32, i32
  }
  func.func @transform_5(%arg0: i32) -> (i32, i32) {
    %c0_i32 = arith.constant 0 : i32
    %c0_i32_0 = arith.constant 0 : i32
    %c0_i32_1 = arith.constant 0 : i32
    return %c0_i32, %c0_i32_0 : i32, i32
  }
  func.func @transform_6(%arg0: i32) -> (i32, i32) {
    %c0_i32 = arith.constant 0 : i32
    %c0_i32_0 = arith.constant 0 : i32
    %c0_i32_1 = arith.constant 0 : i32
    return %c0_i32, %c0_i32_0 : i32, i32
  }
  func.func @transform_7(%arg0: i32) -> (i32, i32) {
    %c0_i32 = arith.constant 0 : i32
    %c0_i32_0 = arith.constant 0 : i32
    %c0_i32_1 = arith.constant 0 : i32
    return %c0_i32, %c0_i32_0 : i32, i32
  }
  func.func @transform_8(%arg0: i32) -> (i32, i32) {
    %c0_i32 = arith.constant 0 : i32
    %c0_i32_0 = arith.constant 0 : i32
    %c0_i32_1 = arith.constant 0 : i32
    return %c0_i32, %c0_i32_0 : i32, i32
  }
  func.func @transform_9(%arg0: i32) -> (i32, i32) {
    %c0_i32 = arith.constant 0 : i32
    %c0_i32_0 = arith.constant 0 : i32
    %c0_i32_1 = arith.constant 0 : i32
    return %c0_i32, %c0_i32_0 : i32, i32
  }
  func.func @transform_10(%arg0: i32) -> (i32, i32) {
    %c0_i32 = arith.constant 0 : i32
    %c0_i32_0 = arith.constant 0 : i32
    %c0_i32_1 = arith.constant 0 : i32
    return %c0_i32, %c0_i32_0 : i32, i32
  }
  func.func @transform_11(%arg0: i32) -> (i32, i32) {
    %c0_i32 = arith.constant 0 : i32
    %c0_i32_0 = arith.constant 0 : i32
    return %arg0, %c0_i32 : i32, i32
  }
}

</mosaic_0001>

<llo_original>
// kernel: tpu_custom_call.1
$region0: #{tpu_custom_call.1}
  #allocation0 [shape = 'u32[]', space=smem, size = 0x4, offset = 0x4, fixed_abs, tag = 'smem constant byte address 0x4 - core index']
  #allocation1 [shape = 'u32[144,128]{1,0:T(1,128)}', space=vmem, size = 0x12000, scoped, tag = 'internal scratch']
  %s0 = inlined_call_operand.vmem [shape: f32[256,32], index: 0, kind: input, shape index: {}]
  %s1 = inlined_call_operand.vmem [shape: bf16[160,84], index: 1, kind: input, shape index: {}]
  %s2 = inlined_call_operand.vmem [shape: f32[1,84], index: 2, kind: input, shape index: {}]
  %s3 = inlined_call_operand.vmem [shape: bf16[420,140], index: 3, kind: input, shape index: {}]
  %s4 = inlined_call_operand.vmem [shape: f32[1,140], index: 4, kind: input, shape index: {}]
  %s5 = inlined_call_operand.vmem [shape: bf16[700,120], index: 5, kind: input, shape index: {}]
  %s6 = inlined_call_operand.vmem [shape: f32[1,120], index: 6, kind: input, shape index: {}]
  %s7 = inlined_call_operand.vmem [shape: bf16[120,84], index: 7, kind: input, shape index: {}]
  %s8 = inlined_call_operand.vmem [shape: f32[1,84], index: 8, kind: input, shape index: {}]
  %s9 = inlined_call_operand.vmem [shape: bf16[84,10], index: 9, kind: input, shape index: {}]
  %s10 = inlined_call_operand.vmem [shape: f32[1,10], index: 10, kind: input, shape index: {}]
  %s11 = inlined_call_operand.hbm [shape: f32[8,10], index: 11, kind: output, shape index: {}]
  %s12 = sld [smem:[#allocation0]]
  $region54: #{tpu_custom_call.1} parent=0
    _
  %s14 = ssub.s32 1, %s12
  %s15 = scalar_select 0, %s14, %s12
  $region1: #{tpu_custom_call.1} parent=0
    #allocation2 [shape = 'u8[4096]{0}', space=vmem, size = 0x1000, scoped, tag = 'output window, operand 0, single buffered']
    #allocation3 [shape = 's32[1]{0}', space=sflag, size = 0x4, scoped, tag = 'scoped memory for tpu_custom_call.1']
    %16 = vsyncpa [#allocation3], 0
    // Predicated region
    $region2: #{tpu_custom_call.1} parent=1 // pred_check
      _
    $region3: #{tpu_custom_call.1} parent=1 // pred_check_branch
      %18 = sbr.rel (0) target = $region5
    $region4: #{tpu_custom_call.1} parent=1 // pred_region
      _
    $region5: #{tpu_custom_call.1} parent=1 // pred_fallthru
      _
    // Predicated region
    $region6: #{tpu_custom_call.1} parent=1 // pred_check
      _
    $region7: #{tpu_custom_call.1} parent=1 // pred_check_branch
      %20 = sbr.rel (0) target = $region9
    $region8: #{tpu_custom_call.1} parent=1 // pred_region
      _
    $region9: #{tpu_custom_call.1} parent=1 // pred_fallthru
      _
    // Predicated region
    $region10: #{tpu_custom_call.1} parent=1 // pred_check
      _
    $region11: #{tpu_custom_call.1} parent=1 // pred_check_branch
      %22 = sbr.rel (0) target = $region13
    $region12: #{tpu_custom_call.1} parent=1 // pred_region
      _
    $region13: #{tpu_custom_call.1} parent=1 // pred_fallthru
      _
    // Predicated region
    $region14: #{tpu_custom_call.1} parent=1 // pred_check
      _
    $region15: #{tpu_custom_call.1} parent=1 // pred_check_branch
      %24 = sbr.rel (0) target = $region17
    $region16: #{tpu_custom_call.1} parent=1 // pred_region
      _
    $region17: #{tpu_custom_call.1} parent=1 // pred_fallthru
      _
    // Predicated region
    $region18: #{tpu_custom_call.1} parent=1 // pred_check
      _
    $region19: #{tpu_custom_call.1} parent=1 // pred_check_branch
      %26 = sbr.rel (0) target = $region21
    $region20: #{tpu_custom_call.1} parent=1 // pred_region
      _
    $region21: #{tpu_custom_call.1} parent=1 // pred_fallthru
      _
    // Predicated region
    $region22: #{tpu_custom_call.1} parent=1 // pred_check
      _
    $region23: #{tpu_custom_call.1} parent=1 // pred_check_branch
      %28 = sbr.rel (0) target = $region25
    $region24: #{tpu_custom_call.1} parent=1 // pred_region
      _
    $region25: #{tpu_custom_call.1} parent=1 // pred_fallthru
      _
    // Predicated region
    $region26: #{tpu_custom_call.1} parent=1 // pred_check
      _
    $region27: #{tpu_custom_call.1} parent=1 // pred_check_branch
      %30 = sbr.rel (0) target = $region29
    $region28: #{tpu_custom_call.1} parent=1 // pred_region
      _
    $region29: #{tpu_custom_call.1} parent=1 // pred_fallthru
      _
    // Predicated region
    $region30: #{tpu_custom_call.1} parent=1 // pred_check
      _
    $region31: #{tpu_custom_call.1} parent=1 // pred_check_branch
      %32 = sbr.rel (0) target = $region33
    $region32: #{tpu_custom_call.1} parent=1 // pred_region
      _
    $region33: #{tpu_custom_call.1} parent=1 // pred_fallthru
      _
    // Predicated region
    $region34: #{tpu_custom_call.1} parent=1 // pred_check
      _
    $region35: #{tpu_custom_call.1} parent=1 // pred_check_branch
      %34 = sbr.rel (0) target = $region37
    $region36: #{tpu_custom_call.1} parent=1 // pred_region
      _
    $region37: #{tpu_custom_call.1} parent=1 // pred_fallthru
      _
    // Predicated region
    $region38: #{tpu_custom_call.1} parent=1 // pred_check
      _
    $region39: #{tpu_custom_call.1} parent=1 // pred_check_branch
      %36 = sbr.rel (0) target = $region41
    $region40: #{tpu_custom_call.1} parent=1 // pred_region
      _
    $region41: #{tpu_custom_call.1} parent=1 // pred_fallthru
      _
    // Predicated region
    $region42: #{tpu_custom_call.1} parent=1 // pred_check
      _
    $region43: #{tpu_custom_call.1} parent=1 // pred_check_branch
      %38 = sbr.rel (0) target = $region45
    $region44: #{tpu_custom_call.1} parent=1 // pred_region
      _
    $region45: #{tpu_custom_call.1} parent=1 // pred_fallthru
      _
    %v40 = vld [vmem:[%s0] sm:$0xff]
    %v41 = vld [vmem:[%s0 + $0x8] sm:$0xff]
    %v42 = vld [vmem:[%s0 + $0x10] sm:$0xff]
    %v43 = vld [vmem:[%s0 + $0x18] sm:$0xff]
    %v44 = vld [vmem:[%s0 + $0x20] sm:$0xff]
    %v45 = vld [vmem:[%s0 + $0x28] sm:$0xff]
    %v46 = vld [vmem:[%s0 + $0x30] sm:$0xff]
    %v47 = vld [vmem:[%s0 + $0x38] sm:$0xff]
    %v48 = vld [vmem:[%s0 + $0x40] sm:$0xff]
    %v49 = vld [vmem:[%s0 + $0x48] sm:$0xff]
    %v50 = vld [vmem:[%s0 + $0x50] sm:$0xff]
    %v51 = vld [vmem:[%s0 + $0x58] sm:$0xff]
    %v52 = vld [vmem:[%s0 + $0x60] sm:$0xff]
    %v53 = vld [vmem:[%s0 + $0x68] sm:$0xff]
    %v54 = vld [vmem:[%s0 + $0x70] sm:$0xff]
    %v55 = vld [vmem:[%s0 + $0x78] sm:$0xff]
    %v56 = vld [vmem:[%s0 + $0x80] sm:$0xff]
    %v57 = vld [vmem:[%s0 + $0x88] sm:$0xff]
    %v58 = vld [vmem:[%s0 + $0x90] sm:$0xff]
    %v59 = vld [vmem:[%s0 + $0x98] sm:$0xff]
    %v60 = vld [vmem:[%s0 + $0xa0] sm:$0xff]
    %v61 = vld [vmem:[%s0 + $0xa8] sm:$0xff]
    %v62 = vld [vmem:[%s0 + $0xb0] sm:$0xff]
    %v63 = vld [vmem:[%s0 + $0xb8] sm:$0xff]
    %v64 = vld [vmem:[%s0 + $0xc0] sm:$0xff]
    %v65 = vld [vmem:[%s0 + $0xc8] sm:$0xff]
    %v66 = vld [vmem:[%s0 + $0xd0] sm:$0xff]
    %v67 = vld [vmem:[%s0 + $0xd8] sm:$0xff]
    %v68 = vld [vmem:[%s0 + $0xe0] sm:$0xff]
    %v69 = vld [vmem:[%s0 + $0xe8] sm:$0xff]
    %v70 = vld [vmem:[%s0 + $0xf0] sm:$0xff]
    %v71 = vld [vmem:[%s0 + $0xf8] sm:$0xff]
    %v72 = vld [vmem:[%s1] sm:$0xf]
    %v73 = vld [vmem:[%s1 + $0x4] sm:$0xf]
    %v74 = vld [vmem:[%s1 + $0x8] sm:$0xf]
    %v75 = vld [vmem:[%s1 + $0xc] sm:$0xf]
    %v76 = vld [vmem:[%s1 + $0x10] sm:$0xf]
    %v77 = vld [vmem:[%s1 + $0x14] sm:$0xf]
    %v78 = vld [vmem:[%s1 + $0x18] sm:$0xf]
    %v79 = vld [vmem:[%s1 + $0x1c] sm:$0xf]
    %v80 = vld [vmem:[%s1 + $0x20] sm:$0xf]
    %v81 = vld [vmem:[%s1 + $0x24] sm:$0xf]
    %v82 = vld [vmem:[%s1 + $0x28] sm:$0xf]
    %v83 = vld [vmem:[%s1 + $0x2c] sm:$0xf]
    %v84 = vld [vmem:[%s1 + $0x30] sm:$0xf]
    %v85 = vld [vmem:[%s1 + $0x34] sm:$0xf]
    %v86 = vld [vmem:[%s1 + $0x38] sm:$0xf]
    %v87 = vld [vmem:[%s1 + $0x3c] sm:$0xf]
    %v88 = vld [vmem:[%s1 + $0x40] sm:$0xf]
    %v89 = vld [vmem:[%s1 + $0x44] sm:$0xf]
    %v90 = vld [vmem:[%s1 + $0x48] sm:$0xf]
    %v91 = vld [vmem:[%s1 + $0x4c] sm:$0xf]
    %v92 = vld [vmem:[%s2] sm:$0x1]
    %107 = vrot.lane.b32.xlu0 %v56, 32
    %v108 = vpop.permute.xlu0 %107
    %109 = vrot.lane.b32.xlu0 %v57, 32
    %v110 = vpop.permute.xlu0 %109
    %111 = vrot.lane.b32.xlu0 %v58, 32
    %v112 = vpop.permute.xlu0 %111
    %113 = vrot.lane.b32.xlu0 %v59, 32
    %v114 = vpop.permute.xlu0 %113
    %115 = vrot.lane.b32.xlu0 %v60, 32
    %v116 = vpop.permute.xlu0 %115
    %117 = vrot.lane.b32.xlu0 %v61, 32
    %v118 = vpop.permute.xlu0 %117
    %119 = vrot.lane.b32.xlu0 %v62, 32
    %v120 = vpop.permute.xlu0 %119
    %121 = vrot.lane.b32.xlu0 %v63, 32
    %v122 = vpop.permute.xlu0 %121
    %123 = vrot.lane.b32.xlu0 %v64, 32
    %v124 = vpop.permute.xlu0 %123
    %125 = vrot.lane.b32.xlu0 %v65, 32
    %v126 = vpop.permute.xlu0 %125
    %127 = vrot.lane.b32.xlu0 %v66, 32
    %v128 = vpop.permute.xlu0 %127
    %129 = vrot.lane.b32.xlu0 %v67, 32
    %v130 = vpop.permute.xlu0 %129
    %131 = vrot.lane.b32.xlu0 %v68, 32
    %v132 = vpop.permute.xlu0 %131
    %133 = vrot.lane.b32.xlu0 %v69, 32
    %v134 = vpop.permute.xlu0 %133
    %163 = vrot.lane.b32.xlu0 %v41, 64
    %v164 = vpop.permute.xlu0 %163
    %165 = vrot.lane.b32.xlu0 %v42, 64
    %v166 = vpop.permute.xlu0 %165
    %167 = vrot.lane.b32.xlu0 %v43, 64
    %v168 = vpop.permute.xlu0 %167
    %169 = vrot.lane.b32.xlu0 %v44, 64
    %v170 = vpop.permute.xlu0 %169
    %171 = vrot.lane.b32.xlu0 %v45, 64
    %v172 = vpop.permute.xlu0 %171
    %173 = vrot.lane.b32.xlu0 %v46, 64
    %v174 = vpop.permute.xlu0 %173
    %175 = vrot.lane.b32.xlu0 %v47, 64
    %v176 = vpop.permute.xlu0 %175
    %177 = vrot.lane.b32.xlu0 %v48, 64
    %v178 = vpop.permute.xlu0 %177
    %179 = vrot.lane.b32.xlu0 %v49, 64
    %v180 = vpop.permute.xlu0 %179
    %181 = vrot.lane.b32.xlu0 %v50, 64
    %v182 = vpop.permute.xlu0 %181
    %183 = vrot.lane.b32.xlu0 %v51, 64
    %v184 = vpop.permute.xlu0 %183
    %185 = vrot.lane.b32.xlu0 %v52, 64
    %v186 = vpop.permute.xlu0 %185
    %187 = vrot.lane.b32.xlu0 %v53, 64
    %v188 = vpop.permute.xlu0 %187
    %189 = vrot.lane.b32.xlu0 %v54, 64
    %v190 = vpop.permute.xlu0 %189
    %206 = vrot.lane.b32.xlu0 %v57, 96
    %v207 = vpop.permute.xlu0 %206
    %208 = vrot.lane.b32.xlu0 %v58, 96
    %v209 = vpop.permute.xlu0 %208
    %210 = vrot.lane.b32.xlu0 %v59, 96
    %v211 = vpop.permute.xlu0 %210
    %212 = vrot.lane.b32.xlu0 %v60, 96
    %v213 = vpop.permute.xlu0 %212
    %214 = vrot.lane.b32.xlu0 %v61, 96
    %v215 = vpop.permute.xlu0 %214
    %216 = vrot.lane.b32.xlu0 %v62, 96
    %v217 = vpop.permute.xlu0 %216
    %218 = vrot.lane.b32.xlu0 %v63, 96
    %v219 = vpop.permute.xlu0 %218
    %220 = vrot.lane.b32.xlu0 %v64, 96
    %v221 = vpop.permute.xlu0 %220
    %222 = vrot.lane.b32.xlu0 %v65, 96
    %v223 = vpop.permute.xlu0 %222
    %224 = vrot.lane.b32.xlu0 %v66, 96
    %v225 = vpop.permute.xlu0 %224
    %226 = vrot.lane.b32.xlu0 %v67, 96
    %v227 = vpop.permute.xlu0 %226
    %228 = vrot.lane.b32.xlu0 %v68, 96
    %v229 = vpop.permute.xlu0 %228
    %230 = vrot.lane.b32.xlu0 %v69, 96
    %v231 = vpop.permute.xlu0 %230
    %232 = vrot.lane.b32.xlu0 %v70, 96
    %v233 = vpop.permute.xlu0 %232
    %vm248 = vcmask 261120
    %v249 = vsel %vm248, %v40, %v108
    %v250 = vsel %vm248, %v41, %v110
    %v251 = vsel %vm248, %v42, %v112
    %v252 = vsel %vm248, %v43, %v114
    %v253 = vsel %vm248, %v44, %v116
    %v254 = vsel %vm248, %v45, %v118
    %v255 = vsel %vm248, %v46, %v120
    %v256 = vsel %vm248, %v47, %v122
    %v257 = vsel %vm248, %v48, %v124
    %v258 = vsel %vm248, %v49, %v126
    %v259 = vsel %vm248, %v50, %v128
    %v260 = vsel %vm248, %v51, %v130
    %v261 = vsel %vm248, %v52, %v132
    %v262 = vsel %vm248, %v53, %v134
    %vm263 = vcmask 523264
    %v264 = vsel %vm263, %v249, %v164
    %v265 = vsel %vm263, %v250, %v166
    %v266 = vsel %vm263, %v251, %v168
    %v267 = vsel %vm263, %v252, %v170
    %v268 = vsel %vm263, %v253, %v172
    %v269 = vsel %vm263, %v254, %v174
    %v270 = vsel %vm263, %v255, %v176
    %v271 = vsel %vm263, %v256, %v178
    %v272 = vsel %vm263, %v257, %v180
    %v273 = vsel %vm263, %v258, %v182
    %v274 = vsel %vm263, %v259, %v184
    %v275 = vsel %vm263, %v260, %v186
    %v276 = vsel %vm263, %v261, %v188
    %v277 = vsel %vm263, %v262, %v190
    %vm278 = vcmask 785408
    %v279 = vsel %vm278, %v264, %v207
    %v280 = vsel %vm278, %v265, %v209
    %v281 = vsel %vm278, %v266, %v211
    %v282 = vsel %vm278, %v267, %v213
    %v283 = vsel %vm278, %v268, %v215
    %v284 = vsel %vm278, %v269, %v217
    %v285 = vsel %vm278, %v270, %v219
    %v286 = vsel %vm278, %v271, %v221
    %v287 = vsel %vm278, %v272, %v223
    %v288 = vsel %vm278, %v273, %v225
    %v289 = vsel %vm278, %v274, %v227
    %v290 = vsel %vm278, %v275, %v229
    %v291 = vsel %vm278, %v276, %v231
    %v292 = vsel %vm278, %v277, %v233
    %v294 = vlaneseq
    %v295 = vshrl.u32 %v294, 7
    %v296 = vsub.s32 0, %v295
    %v297 = vrot.slane %v92, %v296
    %v319 = vunpack.c.l.b16 %v72
    %v320 = vunpack.c.l.b16 %v73
    %v321 = vunpack.c.l.b16 %v74
    %v322 = vunpack.c.l.b16 %v75
    %v323 = vunpack.c.l.b16 %v76
    %v324 = vunpack.c.l.b16 %v77
    %v325 = vunpack.c.l.b16 %v78
    %v326 = vunpack.c.l.b16 %v79
    %v327 = vunpack.c.l.b16 %v80
    %v328 = vunpack.c.l.b16 %v81
    %v329 = vunpack.c.l.b16 %v82
    %v330 = vunpack.c.l.b16 %v83
    %v331 = vunpack.c.l.b16 %v84
    %v332 = vunpack.c.l.b16 %v85
    %v333 = vunpack.c.l.b16 %v86
    %v334 = vunpack.c.l.b16 %v87
    %v335 = vunpack.c.l.b16 %v88
    %v336 = vunpack.c.l.b16 %v89
    %v337 = vunpack.c.l.b16 %v90
    %v338 = vunpack.c.l.b16 %v91
    %v339 = vpack.c.b16 %v320, %v319
    %v340 = vpack.c.b16 %v322, %v321
    %v341 = vpack.c.b16 %v324, %v323
    %v342 = vpack.c.b16 %v326, %v325
    %v343 = vpack.c.b16 %v328, %v327
    %v344 = vpack.c.b16 %v330, %v329
    %v345 = vpack.c.b16 %v332, %v331
    %v346 = vpack.c.b16 %v334, %v333
    %v347 = vpack.c.b16 %v336, %v335
    %v348 = vpack.c.b16 %v338, %v337
    %v359 = vsel %vm248, %v42, 0
    %v361 = vsel %vm248, %v43, 0
    %v363 = vsel %vm248, %v44, 0
    %v365 = vsel %vm248, %v45, 0
    %v367 = vsel %vm248, %v46, 0
    %v369 = vsel %vm248, %v47, 0
    %v371 = vsel %vm248, %v48, 0
    %v373 = vsel %vm248, %v49, 0
    %v375 = vsel %vm248, %v50, 0
    %v377 = vsel %vm248, %v51, 0
    %v379 = vsel %vm248, %v52, 0
    %v381 = vsel %vm248, %v53, 0
    %v383 = vsel %vm248, %v54, 0
    %v386 = vsel %vm248, %v55, 0
    %388 = vmatprep.subr.bf16.mxu0 0
    %389 = vmatpush1.bf16.msra.mxu0 %v339
    %390 = vmatprep.subr.bf16.mxu0 0
    %391 = vmatpush1.bf16.msra.mxu0 %v340
    %392 = vmatprep.subr.bf16.mxu0 0
    %393 = vmatpush1.bf16.msra.mxu0 %v341
    %394 = vmatprep.subr.bf16.mxu0 0
    %395 = vmatpush1.bf16.msra.mxu0 %v342
    %396 = vmatprep.subr.bf16.mxu0 0
    %397 = vmatpush1.bf16.msra.mxu0 %v343
    %398 = vmatprep.subr.bf16.mxu0 0
    %399 = vmatpush1.bf16.msra.mxu0 %v344
    %400 = vmatprep.subr.bf16.mxu0 0
    %401 = vmatpush1.bf16.msra.mxu0 %v345
    %402 = vmatprep.subr.bf16.mxu0 0
    %403 = vmatpush1.bf16.msra.mxu0 %v346
    %404 = vmatprep.subr.bf16.mxu0 0
    %405 = vmatpush1.bf16.msra.mxu0 %v347
    %406 = vmatprep.subr.bf16.mxu0 0
    %407 = vmatpush1.bf16.msra.mxu0 %v348
    %408 = vmatprep.subr.bf16.mxu0 0
    %409 = vmatpush1.bf16.msra.mxu0 0
    %410 = vmatprep.subr.bf16.mxu0 0
    %411 = vmatpush1.bf16.msra.mxu0 0
    %412 = vmatprep.subr.bf16.mxu0 0
    %413 = vmatpush1.bf16.msra.mxu0 0
    %414 = vmatprep.subr.bf16.mxu0 0
    %415 = vmatpush1.bf16.msra.mxu0 0
    %416 = vmatprep.subr.bf16.mxu0 0
    %417 = vmatpush1.bf16.msra.mxu0 0
    %418 = vmatprep.subr.bf16.mxu0 0
    %419 = vmatpush1.bf16.msra.mxu0 0
    %420 = vmatprep.mubr.f32.mxu0 %v359
    %421 = vmatmul.mubr.f32.gmra.mrb[0].mxu0 %v279
    %v422 = vpop.f32.mrb[0].mxu0
    %v423 = vadd.f32 %v297, %v422
    %v424 = vpop.f32.mrb[0].mxu0
    %425 = vmatprep.mubr.f32.mxu0 %v361
    %426 = vmatmul.mubr.f32.gmra.mrb[0].mxu0 %v280
    %v427 = vpop.f32.mrb[0].mxu0
    %v428 = vadd.f32 %v297, %v427
    %v429 = vpop.f32.mrb[0].mxu0
    %430 = vmatprep.mubr.f32.mxu0 %v363
    %431 = vmatmul.mubr.f32.gmra.mrb[0].mxu0 %v281
    %v432 = vpop.f32.mrb[0].mxu0
    %v433 = vadd.f32 %v297, %v432
    %v434 = vpop.f32.mrb[0].mxu0
    %435 = vmatprep.mubr.f32.mxu0 %v365
    %436 = vmatmul.mubr.f32.gmra.mrb[0].mxu0 %v282
    %v437 = vpop.f32.mrb[0].mxu0
    %v438 = vadd.f32 %v297, %v437
    %v439 = vpop.f32.mrb[0].mxu0
    %440 = vmatprep.mubr.f32.mxu0 %v367
    %441 = vmatmul.mubr.f32.gmra.mrb[0].mxu0 %v283
    %v442 = vpop.f32.mrb[0].mxu0
    %v443 = vadd.f32 %v297, %v442
    %v444 = vpop.f32.mrb[0].mxu0
    %445 = vmatprep.mubr.f32.mxu0 %v369
    %446 = vmatmul.mubr.f32.gmra.mrb[0].mxu0 %v284
    %v447 = vpop.f32.mrb[0].mxu0
    %v448 = vadd.f32 %v297, %v447
    %v449 = vpop.f32.mrb[0].mxu0
    %450 = vmatprep.mubr.f32.mxu0 %v371
    %451 = vmatmul.mubr.f32.gmra.mrb[0].mxu0 %v285
    %v452 = vpop.f32.mrb[0].mxu0
    %v453 = vadd.f32 %v297, %v452
    %v454 = vpop.f32.mrb[0].mxu0
    %455 = vmatprep.mubr.f32.mxu0 %v373
    %456 = vmatmul.mubr.f32.gmra.mrb[0].mxu0 %v286
    %v457 = vpop.f32.mrb[0].mxu0
    %v458 = vadd.f32 %v297, %v457
    %v459 = vpop.f32.mrb[0].mxu0
    %460 = vmatprep.mubr.f32.mxu0 %v375
    %461 = vmatmul.mubr.f32.gmra.mrb[0].mxu0 %v287
    %v462 = vpop.f32.mrb[0].mxu0
    %v463 = vadd.f32 %v297, %v462
    %v464 = vpop.f32.mrb[0].mxu0
    %465 = vmatprep.mubr.f32.mxu0 %v377
    %466 = vmatmul.mubr.f32.gmra.mrb[0].mxu0 %v288
    %v467 = vpop.f32.mrb[0].mxu0
    %v468 = vadd.f32 %v297, %v467
    %v469 = vpop.f32.mrb[0].mxu0
    %470 = vmatprep.mubr.f32.mxu0 %v379
    %471 = vmatmul.mubr.f32.gmra.mrb[0].mxu0 %v289
    %v472 = vpop.f32.mrb[0].mxu0
    %v473 = vadd.f32 %v297, %v472
    %v474 = vpop.f32.mrb[0].mxu0
    %475 = vmatprep.mubr.f32.mxu0 %v381
    %476 = vmatmul.mubr.f32.gmra.mrb[0].mxu0 %v290
    %v477 = vpop.f32.mrb[0].mxu0
    %v478 = vadd.f32 %v297, %v477
    %v479 = vpop.f32.mrb[0].mxu0
    %480 = vmatprep.mubr.f32.mxu0 %v383
    %481 = vmatmul.mubr.f32.gmra.mrb[0].mxu0 %v291
    %v482 = vpop.f32.mrb[0].mxu0
    %v483 = vadd.f32 %v297, %v482
    %v484 = vpop.f32.mrb[0].mxu0
    %485 = vmatprep.mubr.f32.mxu0 %v386
    %486 = vmatmul.mubr.f32.gmra.mrb[0].mxu0 %v292
    %v487 = vpop.f32.mrb[0].mxu0
    %v488 = vadd.f32 %v297, %v487
    %v489 = vpop.f32.mrb[0].mxu0
    %490 = vdwg.mxu0
    %v491 = vtanh.pop %v423
    %v492 = vtanh.pop %v428
    %v493 = vtanh.pop %v433
    %v494 = vtanh.pop %v438
    %v495 = vtanh.pop %v443
    %v496 = vtanh.pop %v448
    %v497 = vtanh.pop %v453
    %v498 = vtanh.pop %v458
    %v499 = vtanh.pop %v463
    %v500 = vtanh.pop %v468
    %v501 = vtanh.pop %v473
    %v502 = vtanh.pop %v478
    %v503 = vtanh.pop %v483
    %v504 = vtanh.pop %v488
    %505 = vrot.lane.b32.xlu0 %v41, 32
    %v506 = vpop.permute.xlu0 %505
    %507 = vrot.lane.b32.xlu0 %v42, 32
    %v508 = vpop.permute.xlu0 %507
    %509 = vrot.lane.b32.xlu0 %v43, 32
    %v510 = vpop.permute.xlu0 %509
    %511 = vrot.lane.b32.xlu0 %v44, 32
    %v512 = vpop.permute.xlu0 %511
    %513 = vrot.lane.b32.xlu0 %v45, 32
    %v514 = vpop.permute.xlu0 %513
    %515 = vrot.lane.b32.xlu0 %v46, 32
    %v516 = vpop.permute.xlu0 %515
    %517 = vrot.lane.b32.xlu0 %v47, 32
    %v518 = vpop.permute.xlu0 %517
    %519 = vrot.lane.b32.xlu0 %v48, 32
    %v520 = vpop.permute.xlu0 %519
    %521 = vrot.lane.b32.xlu0 %v49, 32
    %v522 = vpop.permute.xlu0 %521
    %523 = vrot.lane.b32.xlu0 %v50, 32
    %v524 = vpop.permute.xlu0 %523
    %525 = vrot.lane.b32.xlu0 %v51, 32
    %v526 = vpop.permute.xlu0 %525
    %527 = vrot.lane.b32.xlu0 %v52, 32
    %v528 = vpop.permute.xlu0 %527
    %529 = vrot.lane.b32.xlu0 %v53, 32
    %v530 = vpop.permute.xlu0 %529
    %531 = vrot.lane.b32.xlu0 %v54, 32
    %v532 = vpop.permute.xlu0 %531
    %547 = vrot.lane.b32.xlu0 %v57, 64
    %v548 = vpop.permute.xlu0 %547
    %549 = vrot.lane.b32.xlu0 %v58, 64
    %v550 = vpop.permute.xlu0 %549
    %551 = vrot.lane.b32.xlu0 %v59, 64
    %v552 = vpop.permute.xlu0 %551
    %553 = vrot.lane.b32.xlu0 %v60, 64
    %v554 = vpop.permute.xlu0 %553
    %555 = vrot.lane.b32.xlu0 %v61, 64
    %v556 = vpop.permute.xlu0 %555
    %557 = vrot.lane.b32.xlu0 %v62, 64
    %v558 = vpop.permute.xlu0 %557
    %559 = vrot.lane.b32.xlu0 %v63, 64
    %v560 = vpop.permute.xlu0 %559
    %561 = vrot.lane.b32.xlu0 %v64, 64
    %v562 = vpop.permute.xlu0 %561
    %563 = vrot.lane.b32.xlu0 %v65, 64
    %v564 = vpop.permute.xlu0 %563
    %565 = vrot.lane.b32.xlu0 %v66, 64
    %v566 = vpop.permute.xlu0 %565
    %567 = vrot.lane.b32.xlu0 %v67, 64
    %v568 = vpop.permute.xlu0 %567
    %569 = vrot.lane.b32.xlu0 %v68, 64
    %v570 = vpop.permute.xlu0 %569
    %571 = vrot.lane.b32.xlu0 %v69, 64
    %v572 = vpop.permute.xlu0 %571
    %573 = vrot.lane.b32.xlu0 %v70, 64
    %v574 = vpop.permute.xlu0 %573
    %589 = vrot.lane.b32.xlu0 %v42, 96
    %v590 = vpop.permute.xlu0 %589
    %591 = vrot.lane.b32.xlu0 %v43, 96
    %v592 = vpop.permute.xlu0 %591
    %593 = vrot.lane.b32.xlu0 %v44, 96
    %v594 = vpop.permute.xlu0 %593
    %595 = vrot.lane.b32.xlu0 %v45, 96
    %v596 = vpop.permute.xlu0 %595
    %597 = vrot.lane.b32.xlu0 %v46, 96
    %v598 = vpop.permute.xlu0 %597
    %599 = vrot.lane.b32.xlu0 %v47, 96
    %v600 = vpop.permute.xlu0 %599
    %601 = vrot.lane.b32.xlu0 %v48, 96
    %v602 = vpop.permute.xlu0 %601
    %603 = vrot.lane.b32.xlu0 %v49, 96
    %v604 = vpop.permute.xlu0 %603
    %605 = vrot.lane.b32.xlu0 %v50, 96
    %v606 = vpop.permute.xlu0 %605
    %607 = vrot.lane.b32.xlu0 %v51, 96
    %v608 = vpop.permute.xlu0 %607
    %609 = vrot.lane.b32.xlu0 %v52, 96
    %v610 = vpop.permute.xlu0 %609
    %611 = vrot.lane.b32.xlu0 %v53, 96
    %v612 = vpop.permute.xlu0 %611
    %613 = vrot.lane.b32.xlu0 %v54, 96
    %v614 = vpop.permute.xlu0 %613
    %615 = vrot.lane.b32.xlu0 %v55, 96
    %v616 = vpop.permute.xlu0 %615
    %v631 = vsel %vm248, %v56, %v506
    %v632 = vsel %vm248, %v57, %v508
    %v633 = vsel %vm248, %v58, %v510
    %v634 = vsel %vm248, %v59, %v512
    %v635 = vsel %vm248, %v60, %v514
    %v636 = vsel %vm248, %v61, %v516
    %v637 = vsel %vm248, %v62, %v518
    %v638 = vsel %vm248, %v63, %v520
    %v639 = vsel %vm248, %v64, %v522
    %v640 = vsel %vm248, %v65, %v524
    %v641 = vsel %vm248, %v66, %v526
    %v642 = vsel %vm248, %v67, %v528
    %v643 = vsel %vm248, %v68, %v530
    %v644 = vsel %vm248, %v69, %v532
    %v645 = vsel %vm263, %v631, %v548
    %v646 = vsel %vm263, %v632, %v550
    %v647 = vsel %vm263, %v633, %v552
    %v648 = vsel %vm263, %v634, %v554
    %v649 = vsel %vm263, %v635, %v556
    %v650 = vsel %vm263, %v636, %v558
    %v651 = vsel %vm263, %v637, %v560
    %v652 = vsel %vm263, %v638, %v562
    %v653 = vsel %vm263, %v639, %v564
    %v654 = vsel %vm263, %v640, %v566
    %v655 = vsel %vm263, %v641, %v568
    %v656 = vsel %vm263, %v642, %v570
    %v657 = vsel %vm263, %v643, %v572
    %v658 = vsel %vm263, %v644, %v574
    %v659 = vsel %vm278, %v645, %v590
    %v660 = vsel %vm278, %v646, %v592
    %v661 = vsel %vm278, %v647, %v594
    %v662 = vsel %vm278, %v648, %v596
    %v663 = vsel %vm278, %v649, %v598
    %v664 = vsel %vm278, %v650, %v600
    %v665 = vsel %vm278, %v651, %v602
    %v666 = vsel %vm278, %v652, %v604
    %v667 = vsel %vm278, %v653, %v606
    %v668 = vsel %vm278, %v654, %v608
    %v669 = vsel %vm278, %v655, %v610
    %v670 = vsel %vm278, %v656, %v612
    %v671 = vsel %vm278, %v657, %v614
    %v672 = vsel %vm278, %v658, %v616
    %v673 = vsel %vm248, %v58, 0
    %v675 = vsel %vm248, %v59, 0
    %v677 = vsel %vm248, %v60, 0
    %v679 = vsel %vm248, %v61, 0
    %v681 = vsel %vm248, %v62, 0
    %v683 = vsel %vm248, %v63, 0
    %v685 = vsel %vm248, %v64, 0
    %v687 = vsel %vm248, %v65, 0
    %v689 = vsel %vm248, %v66, 0
    %v691 = vsel %vm248, %v67, 0
    %v693 = vsel %vm248, %v68, 0
    %v695 = vsel %vm248, %v69, 0
    %v697 = vsel %vm248, %v70, 0
    %v700 = vsel %vm248, %v71, 0
    %702 = vmatprep.subr.bf16.mxu0 0
    %703 = vmatpush1.bf16.msra.mxu0 %v339
    %704 = vmatprep.subr.bf16.mxu0 0
    %705 = vmatpush1.bf16.msra.mxu0 %v340
    %706 = vmatprep.subr.bf16.mxu0 0
    %707 = vmatpush1.bf16.msra.mxu0 %v341
    %708 = vmatprep.subr.bf16.mxu0 0
    %709 = vmatpush1.bf16.msra.mxu0 %v342
    %710 = vmatprep.subr.bf16.mxu0 0
    %711 = vmatpush1.bf16.msra.mxu0 %v343
    %712 = vmatprep.subr.bf16.mxu0 0
    %713 = vmatpush1.bf16.msra.mxu0 %v344
    %714 = vmatprep.subr.bf16.mxu0 0
    %715 = vmatpush1.bf16.msra.mxu0 %v345
    %716 = vmatprep.subr.bf16.mxu0 0
    %717 = vmatpush1.bf16.msra.mxu0 %v346
    %718 = vmatprep.subr.bf16.mxu0 0
    %719 = vmatpush1.bf16.msra.mxu0 %v347
    %720 = vmatprep.subr.bf16.mxu0 0
    %721 = vmatpush1.bf16.msra.mxu0 %v348
    %722 = vmatprep.subr.bf16.mxu0 0
    %723 = vmatpush1.bf16.msra.mxu0 0
    %724 = vmatprep.subr.bf16.mxu0 0
    %725 = vmatpush1.bf16.msra.mxu0 0
    %726 = vmatprep.subr.bf16.mxu0 0
    %727 = vmatpush1.bf16.msra.mxu0 0
    %728 = vmatprep.subr.bf16.mxu0 0
    %729 = vmatpush1.bf16.msra.mxu0 0
    %730 = vmatprep.subr.bf16.mxu0 0
    %731 = vmatpush1.bf16.msra.mxu0 0
    %732 = vmatprep.subr.bf16.mxu0 0
    %733 = vmatpush1.bf16.msra.mxu0 0
    %734 = vmatprep.mubr.f32.mxu0 %v673
    %735 = vmatmul.mubr.f32.gmra.mrb[0].mxu0 %v659
    %v736 = vpop.f32.mrb[0].mxu0
    %v737 = vadd.f32 %v297, %v736
    %v738 = vpop.f32.mrb[0].mxu0
    %739 = vmatprep.mubr.f32.mxu0 %v675
    %740 = vmatmul.mubr.f32.gmra.mrb[0].mxu0 %v660
    %v741 = vpop.f32.mrb[0].mxu0
    %v742 = vadd.f32 %v297, %v741
    %v743 = vpop.f32.mrb[0].mxu0
    %744 = vmatprep.mubr.f32.mxu0 %v677
    %745 = vmatmul.mubr.f32.gmra.mrb[0].mxu0 %v661
    %v746 = vpop.f32.mrb[0].mxu0
    %v747 = vadd.f32 %v297, %v746
    %v748 = vpop.f32.mrb[0].mxu0
    %749 = vmatprep.mubr.f32.mxu0 %v679
    %750 = vmatmul.mubr.f32.gmra.mrb[0].mxu0 %v662
    %v751 = vpop.f32.mrb[0].mxu0
    %v752 = vadd.f32 %v297, %v751
    %v753 = vpop.f32.mrb[0].mxu0
    %754 = vmatprep.mubr.f32.mxu0 %v681
    %755 = vmatmul.mubr.f32.gmra.mrb[0].mxu0 %v663
    %v756 = vpop.f32.mrb[0].mxu0
    %v757 = vadd.f32 %v297, %v756
    %v758 = vpop.f32.mrb[0].mxu0
    %759 = vmatprep.mubr.f32.mxu0 %v683
    %760 = vmatmul.mubr.f32.gmra.mrb[0].mxu0 %v664
    %v761 = vpop.f32.mrb[0].mxu0
    %v762 = vadd.f32 %v297, %v761
    %v763 = vpop.f32.mrb[0].mxu0
    %764 = vmatprep.mubr.f32.mxu0 %v685
    %765 = vmatmul.mubr.f32.gmra.mrb[0].mxu0 %v665
    %v766 = vpop.f32.mrb[0].mxu0
    %v767 = vadd.f32 %v297, %v766
    %v768 = vpop.f32.mrb[0].mxu0
    %769 = vmatprep.mubr.f32.mxu0 %v687
    %770 = vmatmul.mubr.f32.gmra.mrb[0].mxu0 %v666
    %v771 = vpop.f32.mrb[0].mxu0
    %v772 = vadd.f32 %v297, %v771
    %v773 = vpop.f32.mrb[0].mxu0
    %774 = vmatprep.mubr.f32.mxu0 %v689
    %775 = vmatmul.mubr.f32.gmra.mrb[0].mxu0 %v667
    %v776 = vpop.f32.mrb[0].mxu0
    %v777 = vadd.f32 %v297, %v776
    %v778 = vpop.f32.mrb[0].mxu0
    %779 = vmatprep.mubr.f32.mxu0 %v691
    %780 = vmatmul.mubr.f32.gmra.mrb[0].mxu0 %v668
    %v781 = vpop.f32.mrb[0].mxu0
    %v782 = vadd.f32 %v297, %v781
    %v783 = vpop.f32.mrb[0].mxu0
    %784 = vmatprep.mubr.f32.mxu0 %v693
    %785 = vmatmul.mubr.f32.gmra.mrb[0].mxu0 %v669
    %v786 = vpop.f32.mrb[0].mxu0
    %v787 = vadd.f32 %v297, %v786
    %v788 = vpop.f32.mrb[0].mxu0
    %789 = vmatprep.mubr.f32.mxu0 %v695
    %790 = vmatmul.mubr.f32.gmra.mrb[0].mxu0 %v670
    %v791 = vpop.f32.mrb[0].mxu0
    %v792 = vadd.f32 %v297, %v791
    %v793 = vpop.f32.mrb[0].mxu0
    %794 = vmatprep.mubr.f32.mxu0 %v697
    %795 = vmatmul.mubr.f32.gmra.mrb[0].mxu0 %v671
    %v796 = vpop.f32.mrb[0].mxu0
    %v797 = vadd.f32 %v297, %v796
    %v798 = vpop.f32.mrb[0].mxu0
    %799 = vmatprep.mubr.f32.mxu0 %v700
    %800 = vmatmul.mubr.f32.gmra.mrb[0].mxu0 %v672
    %v801 = vpop.f32.mrb[0].mxu0
    %v802 = vadd.f32 %v297, %v801
    %v803 = vpop.f32.mrb[0].mxu0
    %804 = vdwg.mxu0
    %v805 = vtanh.pop %v737
    %v806 = vtanh.pop %v742
    %v807 = vtanh.pop %v747
    %v808 = vtanh.pop %v752
    %v809 = vtanh.pop %v757
    %v810 = vtanh.pop %v762
    %v811 = vtanh.pop %v767
    %v812 = vtanh.pop %v772
    %v813 = vtanh.pop %v777
    %v814 = vtanh.pop %v782
    %v815 = vtanh.pop %v787
    %v816 = vtanh.pop %v792
    %v817 = vtanh.pop %v797
    %v818 = vtanh.pop %v802
    %v819 = vadd.f32 %v491, %v805
    %v820 = vadd.f32 %v492, %v806
    %v821 = vadd.f32 %v493, %v807
    %v822 = vadd.f32 %v494, %v808
    %v823 = vadd.f32 %v495, %v809
    %v824 = vadd.f32 %v496, %v810
    %v825 = vadd.f32 %v497, %v811
    %v826 = vadd.f32 %v498, %v812
    %v827 = vadd.f32 %v499, %v813
    %v828 = vadd.f32 %v500, %v814
    %v829 = vadd.f32 %v501, %v815
    %v830 = vadd.f32 %v502, %v816
    %v831 = vadd.f32 %v503, %v817
    %v832 = vadd.f32 %v504, %v818
    %843 = vrot.lane.b32.xlu0 %v820, 84
    %v844 = vpop.permute.xlu0 %843
    %845 = vrot.lane.b32.xlu0 %v821, 84
    %v846 = vpop.permute.xlu0 %845
    %847 = vrot.lane.b32.xlu0 %v822, 84
    %v848 = vpop.permute.xlu0 %847
    %849 = vrot.lane.b32.xlu0 %v823, 84
    %v850 = vpop.permute.xlu0 %849
    %851 = vrot.lane.b32.xlu0 %v824, 84
    %v852 = vpop.permute.xlu0 %851
    %853 = vrot.lane.b32.xlu0 %v825, 84
    %v854 = vpop.permute.xlu0 %853
    %855 = vrot.lane.b32.xlu0 %v826, 84
    %v856 = vpop.permute.xlu0 %855
    %857 = vrot.lane.b32.xlu0 %v827, 84
    %v858 = vpop.permute.xlu0 %857
    %859 = vrot.lane.b32.xlu0 %v828, 84
    %v860 = vpop.permute.xlu0 %859
    %861 = vrot.lane.b32.xlu0 %v829, 84
    %v862 = vpop.permute.xlu0 %861
    %874 = vrot.lane.b32.xlu0 %v821, 40
    %v875 = vpop.permute.xlu0 %874
    %876 = vrot.lane.b32.xlu0 %v822, 40
    %v877 = vpop.permute.xlu0 %876
    %878 = vrot.lane.b32.xlu0 %v823, 40
    %v879 = vpop.permute.xlu0 %878
    %880 = vrot.lane.b32.xlu0 %v824, 40
    %v881 = vpop.permute.xlu0 %880
    %882 = vrot.lane.b32.xlu0 %v825, 40
    %v883 = vpop.permute.xlu0 %882
    %884 = vrot.lane.b32.xlu0 %v826, 40
    %v885 = vpop.permute.xlu0 %884
    %886 = vrot.lane.b32.xlu0 %v827, 40
    %v887 = vpop.permute.xlu0 %886
    %888 = vrot.lane.b32.xlu0 %v828, 40
    %v889 = vpop.permute.xlu0 %888
    %890 = vrot.lane.b32.xlu0 %v829, 40
    %v891 = vpop.permute.xlu0 %890
    %892 = vrot.lane.b32.xlu0 %v830, 40
    %v893 = vpop.permute.xlu0 %892
    %905 = vrot.lane.b32.xlu0 %v822, 124
    %v906 = vpop.permute.xlu0 %905
    %907 = vrot.lane.b32.xlu0 %v823, 124
    %v908 = vpop.permute.xlu0 %907
    %909 = vrot.lane.b32.xlu0 %v824, 124
    %v910 = vpop.permute.xlu0 %909
    %911 = vrot.lane.b32.xlu0 %v825, 124
    %v912 = vpop.permute.xlu0 %911
    %913 = vrot.lane.b32.xlu0 %v826, 124
    %v914 = vpop.permute.xlu0 %913
    %915 = vrot.lane.b32.xlu0 %v827, 124
    %v916 = vpop.permute.xlu0 %915
    %917 = vrot.lane.b32.xlu0 %v828, 124
    %v918 = vpop.permute.xlu0 %917
    %919 = vrot.lane.b32.xlu0 %v829, 124
    %v920 = vpop.permute.xlu0 %919
    %921 = vrot.lane.b32.xlu0 %v830, 124
    %v922 = vpop.permute.xlu0 %921
    %923 = vrot.lane.b32.xlu0 %v831, 124
    %v924 = vpop.permute.xlu0 %923
    %936 = vrot.lane.b32.xlu0 %v823, 80
    %v937 = vpop.permute.xlu0 %936
    %938 = vrot.lane.b32.xlu0 %v824, 80
    %v939 = vpop.permute.xlu0 %938
    %940 = vrot.lane.b32.xlu0 %v825, 80
    %v941 = vpop.permute.xlu0 %940
    %942 = vrot.lane.b32.xlu0 %v826, 80
    %v943 = vpop.permute.xlu0 %942
    %944 = vrot.lane.b32.xlu0 %v827, 80
    %v945 = vpop.permute.xlu0 %944
    %946 = vrot.lane.b32.xlu0 %v828, 80
    %v947 = vpop.permute.xlu0 %946
    %948 = vrot.lane.b32.xlu0 %v829, 80
    %v949 = vpop.permute.xlu0 %948
    %950 = vrot.lane.b32.xlu0 %v830, 80
    %v951 = vpop.permute.xlu0 %950
    %952 = vrot.lane.b32.xlu0 %v831, 80
    %v953 = vpop.permute.xlu0 %952
    %954 = vrot.lane.b32.xlu0 %v832, 80
    %v955 = vpop.permute.xlu0 %954
    %vm966 = vcmask 687104
    %v967 = vsel %vm966, %v819, %v844
    %v968 = vsel %vm966, %v820, %v846
    %v969 = vsel %vm966, %v821, %v848
    %v970 = vsel %vm966, %v822, %v850
    %v971 = vsel %vm966, %v823, %v852
    %v972 = vsel %vm966, %v824, %v854
    %v973 = vsel %vm966, %v825, %v856
    %v974 = vsel %vm966, %v826, %v858
    %v975 = vsel %vm966, %v827, %v860
    %v976 = vsel %vm966, %v828, %v862
    %vm977 = vcmask 326656
    %v978 = vsel %vm977, %v844, %v875
    %v979 = vsel %vm977, %v846, %v877
    %v980 = vsel %vm977, %v848, %v879
    %v981 = vsel %vm977, %v850, %v881
    %v982 = vsel %vm977, %v852, %v883
    %v983 = vsel %vm977, %v854, %v885
    %v984 = vsel %vm977, %v856, %v887
    %v985 = vsel %vm977, %v858, %v889
    %v986 = vsel %vm977, %v860, %v891
    %v987 = vsel %vm977, %v862, %v893
    %vm988 = vcmask 1014784
    %v989 = vsel %vm988, %v978, %v906
    %v990 = vsel %vm988, %v979, %v908
    %v991 = vsel %vm988, %v980, %v910
    %v992 = vsel %vm988, %v981, %v912
    %v993 = vsel %vm988, %v982, %v914
    %v994 = vsel %vm988, %v983, %v916
    %v995 = vsel %vm988, %v984, %v918
    %v996 = vsel %vm988, %v985, %v920
    %v997 = vsel %vm988, %v986, %v922
    %v998 = vsel %vm988, %v987, %v924
    %vm999 = vcmask 654336
    %v1000 = vsel %vm999, %v906, %v937
    %v1001 = vsel %vm999, %v908, %v939
    %v1002 = vsel %vm999, %v910, %v941
    %v1003 = vsel %vm999, %v912, %v943
    %v1004 = vsel %vm999, %v914, %v945
    %v1005 = vsel %vm999, %v916, %v947
    %v1006 = vsel %vm999, %v918, %v949
    %v1007 = vsel %vm999, %v920, %v951
    %v1008 = vsel %vm999, %v922, %v953
    %v1009 = vsel %vm999, %v924, %v955
    %v1010 = vld [vmem:[%s3] sm:$0xff]
    %v1011 = vld [vmem:[%s3 + $0x8] sm:$0xff]
    %v1012 = vld [vmem:[%s3 + $0x10] sm:$0xff]
    %v1013 = vld [vmem:[%s3 + $0x18] sm:$0xff]
    %v1014 = vld [vmem:[%s3 + $0x20] sm:$0xff]
    %v1015 = vld [vmem:[%s3 + $0x28] sm:$0xff]
    %v1016 = vld [vmem:[%s3 + $0x30] sm:$0xff]
    %v1017 = vld [vmem:[%s3 + $0x38] sm:$0xff]
    %v1018 = vld [vmem:[%s3 + $0x40] sm:$0xff]
    %v1019 = vld [vmem:[%s3 + $0x48] sm:$0xff]
    %v1020 = vld [vmem:[%s3 + $0x50] sm:$0xff]
    %v1021 = vld [vmem:[%s3 + $0x58] sm:$0xff]
    %v1022 = vld [vmem:[%s3 + $0x60] sm:$0xff]
    %v1023 = vld [vmem:[%s3 + $0x68] sm:$0xff]
    %v1024 = vld [vmem:[%s3 + $0x70] sm:$0xff]
    %v1025 = vld [vmem:[%s3 + $0x78] sm:$0xff]
    %v1026 = vld [vmem:[%s3 + $0x80] sm:$0xff]
    %v1027 = vld [vmem:[%s3 + $0x88] sm:$0xff]
    %v1028 = vld [vmem:[%s3 + $0x90] sm:$0xff]
    %v1029 = vld [vmem:[%s3 + $0x98] sm:$0xff]
    %v1030 = vld [vmem:[%s3 + $0xa0] sm:$0xff]
    %v1031 = vld [vmem:[%s3 + $0xa8] sm:$0xff]
    %v1032 = vld [vmem:[%s3 + $0xb0] sm:$0xff]
    %v1033 = vld [vmem:[%s3 + $0xb8] sm:$0xff]
    %v1034 = vld [vmem:[%s3 + $0xc0] sm:$0xff]
    %v1035 = vld [vmem:[%s3 + $0xc8] sm:$0xff]
    %v1036 = vld [vmem:[%s3 + $0xd0] sm:$0xff]
    %v1037 = vld [vmem:[%s3 + $0xd8] sm:$0xff]
    %v1038 = vld [vmem:[%s3 + $0xe0] sm:$0xff]
    %v1039 = vld [vmem:[%s3 + $0xe8] sm:$0xff]
    %v1040 = vld [vmem:[%s3 + $0xf0] sm:$0xff]
    %v1041 = vld [vmem:[%s3 + $0xf8] sm:$0xff]
    %v1042 = vld [vmem:[%s3 + $0x100] sm:$0xff]
    %v1043 = vld [vmem:[%s3 + $0x108] sm:$0xff]
    %v1044 = vld [vmem:[%s3 + $0x110] sm:$0xff]
    %v1045 = vld [vmem:[%s3 + $0x118] sm:$0xff]
    %v1046 = vld [vmem:[%s3 + $0x120] sm:$0xff]
    %v1047 = vld [vmem:[%s3 + $0x128] sm:$0xff]
    %v1048 = vld [vmem:[%s3 + $0x130] sm:$0xff]
    %v1049 = vld [vmem:[%s3 + $0x138] sm:$0xff]
    %v1050 = vld [vmem:[%s3 + $0x140] sm:$0xff]
    %v1051 = vld [vmem:[%s3 + $0x148] sm:$0xff]
    %v1052 = vld [vmem:[%s3 + $0x150] sm:$0xff]
    %v1053 = vld [vmem:[%s3 + $0x158] sm:$0xff]
    %v1054 = vld [vmem:[%s3 + $0x160] sm:$0xff]
    %v1055 = vld [vmem:[%s3 + $0x168] sm:$0xff]
    %v1056 = vld [vmem:[%s3 + $0x170] sm:$0xff]
    %v1057 = vld [vmem:[%s3 + $0x178] sm:$0xff]
    %v1058 = vld [vmem:[%s3 + $0x180] sm:$0xff]
    %v1059 = vld [vmem:[%s3 + $0x188] sm:$0xff]
    %v1060 = vld [vmem:[%s3 + $0x190] sm:$0xff]
    %v1061 = vld [vmem:[%s3 + $0x198] sm:$0xff]
    %v1062 = vld [vmem:[%s3 + $0x1a0] sm:$0x33]
    %v1063 = vld [vmem:[%s4] sm:$0x3]
    %v1065 = vlaneseq
    %v1066 = vshrl.u32 %v1065, 7
    %v1067 = vsub.s32 0, %v1066
    %v1068 = vrot.slane %v1063, %v1067
    %v1069 = vlaneseq
    %v1070 = vshrl.u32 %v1069, 7
    %v1071 = vsub.s32 1, %v1070
    %v1072 = vrot.slane %v1063, %v1071
    %v1128 = vunpack.c.l.b16 %v1010
    %v1129 = vunpack.c.h.b16 %v1010
    %v1130 = vunpack.c.l.b16 %v1011
    %v1131 = vunpack.c.h.b16 %v1011
    %v1132 = vunpack.c.l.b16 %v1012
    %v1133 = vunpack.c.h.b16 %v1012
    %v1134 = vunpack.c.l.b16 %v1013
    %v1135 = vunpack.c.h.b16 %v1013
    %v1136 = vunpack.c.l.b16 %v1014
    %v1137 = vunpack.c.h.b16 %v1014
    %v1138 = vunpack.c.l.b16 %v1015
    %v1139 = vunpack.c.h.b16 %v1015
    %v1140 = vunpack.c.l.b16 %v1016
    %v1141 = vunpack.c.h.b16 %v1016
    %v1142 = vunpack.c.l.b16 %v1017
    %v1143 = vunpack.c.h.b16 %v1017
    %v1144 = vunpack.c.l.b16 %v1018
    %v1145 = vunpack.c.h.b16 %v1018
    %v1146 = vunpack.c.l.b16 %v1019
    %v1147 = vunpack.c.h.b16 %v1019
    %v1148 = vunpack.c.l.b16 %v1020
    %v1149 = vunpack.c.h.b16 %v1020
    %v1150 = vunpack.c.l.b16 %v1021
    %v1151 = vunpack.c.h.b16 %v1021
    %v1152 = vunpack.c.l.b16 %v1022
    %v1153 = vunpack.c.h.b16 %v1022
    %v1154 = vunpack.c.l.b16 %v1023
    %v1155 = vunpack.c.h.b16 %v1023
    %v1156 = vunpack.c.l.b16 %v1024
    %v1157 = vunpack.c.h.b16 %v1024
    %v1158 = vunpack.c.l.b16 %v1025
    %v1159 = vunpack.c.h.b16 %v1025
    %v1160 = vunpack.c.l.b16 %v1026
    %v1161 = vunpack.c.h.b16 %v1026
    %v1162 = vunpack.c.l.b16 %v1027
    %v1163 = vunpack.c.h.b16 %v1027
    %v1164 = vunpack.c.l.b16 %v1028
    %v1165 = vunpack.c.h.b16 %v1028
    %v1166 = vunpack.c.l.b16 %v1029
    %v1167 = vunpack.c.h.b16 %v1029
    %v1168 = vunpack.c.l.b16 %v1030
    %v1169 = vunpack.c.h.b16 %v1030
    %v1170 = vunpack.c.l.b16 %v1031
    %v1171 = vunpack.c.h.b16 %v1031
    %v1172 = vunpack.c.l.b16 %v1032
    %v1173 = vunpack.c.h.b16 %v1032
    %v1174 = vunpack.c.l.b16 %v1033
    %v1175 = vunpack.c.h.b16 %v1033
    %v1176 = vunpack.c.l.b16 %v1034
    %v1177 = vunpack.c.h.b16 %v1034
    %v1178 = vunpack.c.l.b16 %v1035
    %v1179 = vunpack.c.h.b16 %v1035
    %v1180 = vunpack.c.l.b16 %v1036
    %v1181 = vunpack.c.h.b16 %v1036
    %v1182 = vunpack.c.l.b16 %v1037
    %v1183 = vunpack.c.h.b16 %v1037
    %v1184 = vunpack.c.l.b16 %v1038
    %v1185 = vunpack.c.h.b16 %v1038
    %v1186 = vunpack.c.l.b16 %v1039
    %v1187 = vunpack.c.h.b16 %v1039
    %v1188 = vunpack.c.l.b16 %v1040
    %v1189 = vunpack.c.h.b16 %v1040
    %v1190 = vunpack.c.l.b16 %v1041
    %v1191 = vunpack.c.h.b16 %v1041
    %v1192 = vunpack.c.l.b16 %v1042
    %v1193 = vunpack.c.h.b16 %v1042
    %v1194 = vunpack.c.l.b16 %v1043
    %v1195 = vunpack.c.h.b16 %v1043
    %v1196 = vunpack.c.l.b16 %v1044
    %v1197 = vunpack.c.h.b16 %v1044
    %v1198 = vunpack.c.l.b16 %v1045
    %v1199 = vunpack.c.h.b16 %v1045
    %v1200 = vunpack.c.l.b16 %v1046
    %v1201 = vunpack.c.h.b16 %v1046
    %v1202 = vunpack.c.l.b16 %v1047
    %v1203 = vunpack.c.h.b16 %v1047
    %v1204 = vunpack.c.l.b16 %v1048
    %v1205 = vunpack.c.h.b16 %v1048
    %v1206 = vunpack.c.l.b16 %v1049
    %v1207 = vunpack.c.h.b16 %v1049
    %v1208 = vunpack.c.l.b16 %v1050
    %v1209 = vunpack.c.h.b16 %v1050
    %v1210 = vunpack.c.l.b16 %v1051
    %v1211 = vunpack.c.h.b16 %v1051
    %v1212 = vunpack.c.l.b16 %v1052
    %v1213 = vunpack.c.h.b16 %v1052
    %v1214 = vunpack.c.l.b16 %v1053
    %v1215 = vunpack.c.h.b16 %v1053
    %v1216 = vunpack.c.l.b16 %v1054
    %v1217 = vunpack.c.h.b16 %v1054
    %v1218 = vunpack.c.l.b16 %v1055
    %v1219 = vunpack.c.h.b16 %v1055
    %v1220 = vunpack.c.l.b16 %v1056
    %v1221 = vunpack.c.h.b16 %v1056
    %v1222 = vunpack.c.l.b16 %v1057
    %v1223 = vunpack.c.h.b16 %v1057
    %v1224 = vunpack.c.l.b16 %v1058
    %v1225 = vunpack.c.h.b16 %v1058
    %v1226 = vunpack.c.l.b16 %v1059
    %v1227 = vunpack.c.h.b16 %v1059
    %v1228 = vunpack.c.l.b16 %v1060
    %v1229 = vunpack.c.h.b16 %v1060
    %v1230 = vunpack.c.l.b16 %v1061
    %v1231 = vunpack.c.h.b16 %v1061
    %v1232 = vunpack.c.l.b16 %v1062
    %v1233 = vunpack.c.h.b16 %v1062
    %v1234 = vpack.c.b16 %v1130, %v1128
    %v1235 = vpack.c.b16 %v1131, %v1129
    %v1236 = vpack.c.b16 %v1134, %v1132
    %v1237 = vpack.c.b16 %v1135, %v1133
    %v1238 = vpack.c.b16 %v1138, %v1136
    %v1239 = vpack.c.b16 %v1139, %v1137
    %v1240 = vpack.c.b16 %v1142, %v1140
    %v1241 = vpack.c.b16 %v1143, %v1141
    %v1242 = vpack.c.b16 %v1146, %v1144
    %v1243 = vpack.c.b16 %v1147, %v1145
    %v1244 = vpack.c.b16 %v1150, %v1148
    %v1245 = vpack.c.b16 %v1151, %v1149
    %v1246 = vpack.c.b16 %v1154, %v1152
    %v1247 = vpack.c.b16 %v1155, %v1153
    %v1248 = vpack.c.b16 %v1158, %v1156
    %v1249 = vpack.c.b16 %v1159, %v1157
    %v1250 = vpack.c.b16 %v1162, %v1160
    %v1251 = vpack.c.b16 %v1163, %v1161
    %v1252 = vpack.c.b16 %v1166, %v1164
    %v1253 = vpack.c.b16 %v1167, %v1165
    %v1254 = vpack.c.b16 %v1170, %v1168
    %v1255 = vpack.c.b16 %v1171, %v1169
    %v1256 = vpack.c.b16 %v1174, %v1172
    %v1257 = vpack.c.b16 %v1175, %v1173
    %v1258 = vpack.c.b16 %v1178, %v1176
    %v1259 = vpack.c.b16 %v1179, %v1177
    %v1260 = vpack.c.b16 %v1182, %v1180
    %v1261 = vpack.c.b16 %v1183, %v1181
    %v1262 = vpack.c.b16 %v1186, %v1184
    %v1263 = vpack.c.b16 %v1187, %v1185
    %v1264 = vpack.c.b16 %v1190, %v1188
    %v1265 = vpack.c.b16 %v1191, %v1189
    %v1266 = vpack.c.b16 %v1194, %v1192
    %v1267 = vpack.c.b16 %v1195, %v1193
    %v1268 = vpack.c.b16 %v1198, %v1196
    %v1269 = vpack.c.b16 %v1199, %v1197
    %v1270 = vpack.c.b16 %v1202, %v1200
    %v1271 = vpack.c.b16 %v1203, %v1201
    %v1272 = vpack.c.b16 %v1206, %v1204
    %v1273 = vpack.c.b16 %v1207, %v1205
    %v1274 = vpack.c.b16 %v1210, %v1208
    %v1275 = vpack.c.b16 %v1211, %v1209
    %v1276 = vpack.c.b16 %v1214, %v1212
    %v1277 = vpack.c.b16 %v1215, %v1213
    %v1278 = vpack.c.b16 %v1218, %v1216
    %v1279 = vpack.c.b16 %v1219, %v1217
    %v1280 = vpack.c.b16 %v1222, %v1220
    %v1281 = vpack.c.b16 %v1223, %v1221
    %v1282 = vpack.c.b16 %v1226, %v1224
    %v1283 = vpack.c.b16 %v1227, %v1225
    %v1284 = vpack.c.b16 %v1230, %v1228
    %v1285 = vpack.c.b16 %v1231, %v1229
    %v1286 = vpack.c.b16 %v1232, %v1232
    %v1287 = vpack.c.b16 %v1233, %v1233
    %vm1340 = vcmask 293888
    %v1341 = vsel %vm1340, %v937, 0
    %v1343 = vsel %vm1340, %v939, 0
    %v1345 = vsel %vm1340, %v941, 0
    %v1347 = vsel %vm1340, %v943, 0
    %v1349 = vsel %vm1340, %v945, 0
    %v1351 = vsel %vm1340, %v947, 0
    %v1353 = vsel %vm1340, %v949, 0
    %v1355 = vsel %vm1340, %v951, 0
    %v1357 = vsel %vm1340, %v953, 0
    %v1359 = vsel %vm1340, %v955, 0
    %vm1361 = vcmask 1041408
    %v1363 = vsel %vm1361, %v1286, 0
    %v1366 = vsel %vm1361, %v1287, 0
    %1368 = vmatprep.subr.bf16.mxu0 %v1235
    %1369 = vmatpush1.bf16.msra.mxu0 %v1234
    %1370 = vmatprep.subr.bf16.mxu0 %v1237
    %1371 = vmatpush1.bf16.msra.mxu0 %v1236
    %1372 = vmatprep.subr.bf16.mxu0 %v1239
    %1373 = vmatpush1.bf16.msra.mxu0 %v1238
    %1374 = vmatprep.subr.bf16.mxu0 %v1241
    %1375 = vmatpush1.bf16.msra.mxu0 %v1240
    %1376 = vmatprep.subr.bf16.mxu0 %v1243
    %1377 = vmatpush1.bf16.msra.mxu0 %v1242
    %1378 = vmatprep.subr.bf16.mxu0 %v1245
    %1379 = vmatpush1.bf16.msra.mxu0 %v1244
    %1380 = vmatprep.subr.bf16.mxu0 %v1247
    %1381 = vmatpush1.bf16.msra.mxu0 %v1246
    %1382 = vmatprep.subr.bf16.mxu0 %v1249
    %1383 = vmatpush1.bf16.msra.mxu0 %v1248
    %1384 = vmatprep.subr.bf16.mxu0 %v1251
    %1385 = vmatpush1.bf16.msra.mxu0 %v1250
    %1386 = vmatprep.subr.bf16.mxu0 %v1253
    %1387 = vmatpush1.bf16.msra.mxu0 %v1252
    %1388 = vmatprep.subr.bf16.mxu0 %v1255
    %1389 = vmatpush1.bf16.msra.mxu0 %v1254
    %1390 = vmatprep.subr.bf16.mxu0 %v1257
    %1391 = vmatpush1.bf16.msra.mxu0 %v1256
    %1392 = vmatprep.subr.bf16.mxu0 %v1259
    %1393 = vmatpush1.bf16.msra.mxu0 %v1258
    %1394 = vmatprep.subr.bf16.mxu0 %v1261
    %1395 = vmatpush1.bf16.msra.mxu0 %v1260
    %1396 = vmatprep.subr.bf16.mxu0 %v1263
    %1397 = vmatpush1.bf16.msra.mxu0 %v1262
    %1398 = vmatprep.subr.bf16.mxu0 %v1265
    %1399 = vmatpush1.bf16.msra.mxu0 %v1264
    %1400 = vmatprep.mubr.f32.mxu0 %v989
    %1401 = vmatmul.mubr.f32.gmra.mrb[0].mxu0 %v967
    %v1402 = vpop.f32.mrb[0].mxu0
    %v1403 = vadd.f32 %v1068, %v1402
    %v1404 = vpop.f32.mrb[0].mxu0
    %v1405 = vadd.f32 %v1072, %v1404
    %1406 = vmatprep.mubr.f32.mxu0 %v990
    %1407 = vmatmul.mubr.f32.gmra.mrb[0].mxu0 %v968
    %v1408 = vpop.f32.mrb[0].mxu0
    %v1409 = vadd.f32 %v1068, %v1408
    %v1410 = vpop.f32.mrb[0].mxu0
    %v1411 = vadd.f32 %v1072, %v1410
    %1412 = vmatprep.mubr.f32.mxu0 %v991
    %1413 = vmatmul.mubr.f32.gmra.mrb[0].mxu0 %v969
    %v1414 = vpop.f32.mrb[0].mxu0
    %v1415 = vadd.f32 %v1068, %v1414
    %v1416 = vpop.f32.mrb[0].mxu0
    %v1417 = vadd.f32 %v1072, %v1416
    %1418 = vmatprep.mubr.f32.mxu0 %v992
    %1419 = vmatmul.mubr.f32.gmra.mrb[0].mxu0 %v970
    %v1420 = vpop.f32.mrb[0].mxu0
    %v1421 = vadd.f32 %v1068, %v1420
    %v1422 = vpop.f32.mrb[0].mxu0
    %v1423 = vadd.f32 %v1072, %v1422
    %1424 = vmatprep.mubr.f32.mxu0 %v993
    %1425 = vmatmul.mubr.f32.gmra.mrb[0].mxu0 %v971
    %v1426 = vpop.f32.mrb[0].mxu0
    %v1427 = vadd.f32 %v1068, %v1426
    %v1428 = vpop.f32.mrb[0].mxu0
    %v1429 = vadd.f32 %v1072, %v1428
    %1430 = vmatprep.mubr.f32.mxu0 %v994
    %1431 = vmatmul.mubr.f32.gmra.mrb[0].mxu0 %v972
    %v1432 = vpop.f32.mrb[0].mxu0
    %v1433 = vadd.f32 %v1068, %v1432
    %v1434 = vpop.f32.mrb[0].mxu0
    %v1435 = vadd.f32 %v1072, %v1434
    %1436 = vmatprep.mubr.f32.mxu0 %v995
    %1437 = vmatmul.mubr.f32.gmra.mrb[0].mxu0 %v973
    %v1438 = vpop.f32.mrb[0].mxu0
    %v1439 = vadd.f32 %v1068, %v1438
    %v1440 = vpop.f32.mrb[0].mxu0
    %v1441 = vadd.f32 %v1072, %v1440
    %1442 = vmatprep.mubr.f32.mxu0 %v996
    %1443 = vmatmul.mubr.f32.gmra.mrb[0].mxu0 %v974
    %v1444 = vpop.f32.mrb[0].mxu0
    %v1445 = vadd.f32 %v1068, %v1444
    %v1446 = vpop.f32.mrb[0].mxu0
    %v1447 = vadd.f32 %v1072, %v1446
    %1448 = vmatprep.mubr.f32.mxu0 %v997
    %1449 = vmatmul.mubr.f32.gmra.mrb[0].mxu0 %v975
    %v1450 = vpop.f32.mrb[0].mxu0
    %v1451 = vadd.f32 %v1068, %v1450
    %v1452 = vpop.f32.mrb[0].mxu0
    %v1453 = vadd.f32 %v1072, %v1452
    %1454 = vmatprep.mubr.f32.mxu0 %v998
    %1455 = vmatmul.mubr.f32.gmra.mrb[0].mxu0 %v976
    %v1456 = vpop.f32.mrb[0].mxu0
    %v1457 = vadd.f32 %v1068, %v1456
    %v1458 = vpop.f32.mrb[0].mxu0
    %v1459 = vadd.f32 %v1072, %v1458
    %1460 = vdwg.mxu0
    %1461 = vmatprep.subr.bf16.mxu0 %v1267
    %1462 = vmatpush1.bf16.msra.mxu0 %v1266
    %1463 = vmatprep.subr.bf16.mxu0 %v1269
    %1464 = vmatpush1.bf16.msra.mxu0 %v1268
    %1465 = vmatprep.subr.bf16.mxu0 %v1271
    %1466 = vmatpush1.bf16.msra.mxu0 %v1270
    %1467 = vmatprep.subr.bf16.mxu0 %v1273
    %1468 = vmatpush1.bf16.msra.mxu0 %v1272
    %1469 = vmatprep.subr.bf16.mxu0 %v1275
    %1470 = vmatpush1.bf16.msra.mxu0 %v1274
    %1471 = vmatprep.subr.bf16.mxu0 %v1277
    %1472 = vmatpush1.bf16.msra.mxu0 %v1276
    %1473 = vmatprep.subr.bf16.mxu0 %v1279
    %1474 = vmatpush1.bf16.msra.mxu0 %v1278
    %1475 = vmatprep.subr.bf16.mxu0 %v1281
    %1476 = vmatpush1.bf16.msra.mxu0 %v1280
    %1477 = vmatprep.subr.bf16.mxu0 %v1283
    %1478 = vmatpush1.bf16.msra.mxu0 %v1282
    %1479 = vmatprep.subr.bf16.mxu0 %v1285
    %1480 = vmatpush1.bf16.msra.mxu0 %v1284
    %1481 = vmatprep.subr.bf16.mxu0 %v1366
    %1482 = vmatpush1.bf16.msra.mxu0 %v1363
    %1483 = vmatprep.subr.bf16.mxu0 0
    %1484 = vmatpush1.bf16.msra.mxu0 0
    %1485 = vmatprep.subr.bf16.mxu0 0
    %1486 = vmatpush1.bf16.msra.mxu0 0
    %1487 = vmatprep.subr.bf16.mxu0 0
    %1488 = vmatpush1.bf16.msra.mxu0 0
    %1489 = vmatprep.subr.bf16.mxu0 0
    %1490 = vmatpush1.bf16.msra.mxu0 0
    %1491 = vmatprep.subr.bf16.mxu0 0
    %1492 = vmatpush1.bf16.msra.mxu0 0
    %1493 = vmatprep.mubr.f32.mxu0 %v1341
    %1494 = vmatmul.mubr.f32.gmra.mrb[0].mxu0 %v1000
    %v1495 = vpop.f32.mrb[0].mxu0
    %v1496 = vadd.f32 %v1403, %v1495
    %v1497 = vpop.f32.mrb[0].mxu0
    %v1498 = vadd.f32 %v1405, %v1497
    %1499 = vmatprep.mubr.f32.mxu0 %v1343
    %1500 = vmatmul.mubr.f32.gmra.mrb[0].mxu0 %v1001
    %v1501 = vpop.f32.mrb[0].mxu0
    %v1502 = vadd.f32 %v1409, %v1501
    %v1503 = vpop.f32.mrb[0].mxu0
    %v1504 = vadd.f32 %v1411, %v1503
    %1505 = vmatprep.mubr.f32.mxu0 %v1345
    %1506 = vmatmul.mubr.f32.gmra.mrb[0].mxu0 %v1002
    %v1507 = vpop.f32.mrb[0].mxu0
    %v1508 = vadd.f32 %v1415, %v1507
    %v1509 = vpop.f32.mrb[0].mxu0
    %v1510 = vadd.f32 %v1417, %v1509
    %1511 = vmatprep.mubr.f32.mxu0 %v1347
    %1512 = vmatmul.mubr.f32.gmra.mrb[0].mxu0 %v1003
    %v1513 = vpop.f32.mrb[0].mxu0
    %v1514 = vadd.f32 %v1421, %v1513
    %v1515 = vpop.f32.mrb[0].mxu0
    %v1516 = vadd.f32 %v1423, %v1515
    %1517 = vmatprep.mubr.f32.mxu0 %v1349
    %1518 = vmatmul.mubr.f32.gmra.mrb[0].mxu0 %v1004
    %v1519 = vpop.f32.mrb[0].mxu0
    %v1520 = vadd.f32 %v1427, %v1519
    %v1521 = vpop.f32.mrb[0].mxu0
    %v1522 = vadd.f32 %v1429, %v1521
    %1523 = vmatprep.mubr.f32.mxu0 %v1351
    %1524 = vmatmul.mubr.f32.gmra.mrb[0].mxu0 %v1005
    %v1525 = vpop.f32.mrb[0].mxu0
    %v1526 = vadd.f32 %v1433, %v1525
    %v1527 = vpop.f32.mrb[0].mxu0
    %v1528 = vadd.f32 %v1435, %v1527
    %1529 = vmatprep.mubr.f32.mxu0 %v1353
    %1530 = vmatmul.mubr.f32.gmra.mrb[0].mxu0 %v1006
    %v1531 = vpop.f32.mrb[0].mxu0
    %v1532 = vadd.f32 %v1439, %v1531
    %v1533 = vpop.f32.mrb[0].mxu0
    %v1534 = vadd.f32 %v1441, %v1533
    %1535 = vmatprep.mubr.f32.mxu0 %v1355
    %1536 = vmatmul.mubr.f32.gmra.mrb[0].mxu0 %v1007
    %v1537 = vpop.f32.mrb[0].mxu0
    %v1538 = vadd.f32 %v1445, %v1537
    %v1539 = vpop.f32.mrb[0].mxu0
    %v1540 = vadd.f32 %v1447, %v1539
    %1541 = vmatprep.mubr.f32.mxu0 %v1357
    %1542 = vmatmul.mubr.f32.gmra.mrb[0].mxu0 %v1008
    %v1543 = vpop.f32.mrb[0].mxu0
    %v1544 = vadd.f32 %v1451, %v1543
    %v1545 = vpop.f32.mrb[0].mxu0
    %v1546 = vadd.f32 %v1453, %v1545
    %1547 = vmatprep.mubr.f32.mxu0 %v1359
    %1548 = vmatmul.mubr.f32.gmra.mrb[0].mxu0 %v1009
    %v1549 = vpop.f32.mrb[0].mxu0
    %v1550 = vadd.f32 %v1457, %v1549
    %v1551 = vpop.f32.mrb[0].mxu0
    %v1552 = vadd.f32 %v1459, %v1551
    %1553 = vdwg.mxu0
    %v1554 = vtanh.pop %v1496
    %v1555 = vtanh.pop %v1498
    %v1556 = vtanh.pop %v1502
    %v1557 = vtanh.pop %v1504
    %v1558 = vtanh.pop %v1508
    %v1559 = vtanh.pop %v1510
    %v1560 = vtanh.pop %v1514
    %v1561 = vtanh.pop %v1516
    %v1562 = vtanh.pop %v1520
    %v1563 = vtanh.pop %v1522
    %v1564 = vtanh.pop %v1526
    %v1565 = vtanh.pop %v1528
    %v1566 = vtanh.pop %v1532
    %v1567 = vtanh.pop %v1534
    %v1568 = vtanh.pop %v1538
    %v1569 = vtanh.pop %v1540
    %v1570 = vtanh.pop %v1544
    %v1571 = vtanh.pop %v1546
    %v1572 = vtanh.pop %v1550
    %v1573 = vtanh.pop %v1552
    %v1574 = vadd.f32 %v1554, %v1556
    %v1575 = vadd.f32 %v1555, %v1557
    %v1576 = vadd.f32 %v1558, %v1560
    %v1577 = vadd.f32 %v1559, %v1561
    %v1578 = vadd.f32 %v1562, %v1564
    %v1579 = vadd.f32 %v1563, %v1565
    %v1580 = vadd.f32 %v1566, %v1568
    %v1581 = vadd.f32 %v1567, %v1569
    %v1582 = vadd.f32 %v1570, %v1572
    %v1583 = vadd.f32 %v1571, %v1573
    %1586 = vrot.lane.b32.xlu0 %v1576, 12
    %v1587 = vpop.permute.xlu0 %1586
    %1588 = vrot.lane.b32.xlu0 %v1577, 12
    %v1589 = vpop.permute.xlu0 %1588
    %vm1590 = vcmask 97280
    %v1591 = vsel %vm1590, %v1587, %v1589
    %1596 = vrot.lane.b32.xlu0 %v1578, 24
    %v1597 = vpop.permute.xlu0 %1596
    %1598 = vrot.lane.b32.xlu0 %v1579, 24
    %v1599 = vpop.permute.xlu0 %1598
    %vm1600 = vcmask 195584
    %v1601 = vsel %vm1600, %v1597, %v1599
    %1606 = vrot.lane.b32.xlu0 %v1580, 36
    %v1607 = vpop.permute.xlu0 %1606
    %1608 = vrot.lane.b32.xlu0 %v1581, 36
    %v1609 = vpop.permute.xlu0 %1608
    %v1610 = vsel %vm1340, %v1607, %v1609
    %1615 = vrot.lane.b32.xlu0 %v1582, 48
    %v1616 = vpop.permute.xlu0 %1615
    %1617 = vrot.lane.b32.xlu0 %v1583, 48
    %v1618 = vpop.permute.xlu0 %1617
    %vm1619 = vcmask 392192
    %v1620 = vsel %vm1619, %v1616, %v1618
    %v1622 = vsel %vm1590, %v1575, %v1587
    %v1623 = vsel %vm1600, %v1591, %v1597
    %v1624 = vsel %vm1340, %v1601, %v1607
    %v1625 = vsel %vm1619, %v1610, %v1616
    %v1626 = vld [vmem:[%s5] sm:$0xf]
    %v1627 = vld [vmem:[%s5 + $0x4] sm:$0xf]
    %v1628 = vld [vmem:[%s5 + $0x8] sm:$0xf]
    %v1629 = vld [vmem:[%s5 + $0xc] sm:$0xf]
    %v1630 = vld [vmem:[%s5 + $0x10] sm:$0xf]
    %v1631 = vld [vmem:[%s5 + $0x14] sm:$0xf]
    %v1632 = vld [vmem:[%s5 + $0x18] sm:$0xf]
    %v1633 = vld [vmem:[%s5 + $0x1c] sm:$0xf]
    %v1634 = vld [vmem:[%s5 + $0x20] sm:$0xf]
    %v1635 = vld [vmem:[%s5 + $0x24] sm:$0xf]
    %v1636 = vld [vmem:[%s5 + $0x28] sm:$0xf]
    %v1637 = vld [vmem:[%s5 + $0x2c] sm:$0xf]
    %v1638 = vld [vmem:[%s5 + $0x30] sm:$0xf]
    %v1639 = vld [vmem:[%s5 + $0x34] sm:$0xf]
    %v1640 = vld [vmem:[%s5 + $0x38] sm:$0xf]
    %v1641 = vld [vmem:[%s5 + $0x3c] sm:$0xf]
    %v1642 = vld [vmem:[%s5 + $0x40] sm:$0xf]
    %v1643 = vld [vmem:[%s5 + $0x44] sm:$0xf]
    %v1644 = vld [vmem:[%s5 + $0x48] sm:$0xf]
    %v1645 = vld [vmem:[%s5 + $0x4c] sm:$0xf]
    %v1646 = vld [vmem:[%s5 + $0x50] sm:$0xf]
    %v1647 = vld [vmem:[%s5 + $0x54] sm:$0xf]
    %v1648 = vld [vmem:[%s5 + $0x58] sm:$0xf]
    %v1649 = vld [vmem:[%s5 + $0x5c] sm:$0xf]
    %v1650 = vld [vmem:[%s5 + $0x60] sm:$0xf]
    %v1651 = vld [vmem:[%s5 + $0x64] sm:$0xf]
    %v1652 = vld [vmem:[%s5 + $0x68] sm:$0xf]
    %v1653 = vld [vmem:[%s5 + $0x6c] sm:$0xf]
    %v1654 = vld [vmem:[%s5 + $0x70] sm:$0xf]
    %v1655 = vld [vmem:[%s5 + $0x74] sm:$0xf]
    %v1656 = vld [vmem:[%s5 + $0x78] sm:$0xf]
    %v1657 = vld [vmem:[%s5 + $0x7c] sm:$0xf]
    %v1658 = vld [vmem:[%s5 + $0x80] sm:$0xf]
    %v1659 = vld [vmem:[%s5 + $0x84] sm:$0xf]
    %v1660 = vld [vmem:[%s5 + $0x88] sm:$0xf]
    %v1661 = vld [vmem:[%s5 + $0x8c] sm:$0xf]
    %v1662 = vld [vmem:[%s5 + $0x90] sm:$0xf]
    %v1663 = vld [vmem:[%s5 + $0x94] sm:$0xf]
    %v1664 = vld [vmem:[%s5 + $0x98] sm:$0xf]
    %v1665 = vld [vmem:[%s5 + $0x9c] sm:$0xf]
    %v1666 = vld [vmem:[%s5 + $0xa0] sm:$0xf]
    %v1667 = vld [vmem:[%s5 + $0xa4] sm:$0xf]
    %v1668 = vld [vmem:[%s5 + $0xa8] sm:$0xf]
    %v1669 = vld [vmem:[%s5 + $0xac] sm:$0xf]
    %v1670 = vld [vmem:[%s5 + $0xb0] sm:$0xf]
    %v1671 = vld [vmem:[%s5 + $0xb4] sm:$0xf]
    %v1672 = vld [vmem:[%s5 + $0xb8] sm:$0xf]
    %v1673 = vld [vmem:[%s5 + $0xbc] sm:$0xf]
    %v1674 = vld [vmem:[%s5 + $0xc0] sm:$0xf]
    %v1675 = vld [vmem:[%s5 + $0xc4] sm:$0xf]
    %v1676 = vld [vmem:[%s5 + $0xc8] sm:$0xf]
    %v1677 = vld [vmem:[%s5 + $0xcc] sm:$0xf]
    %v1678 = vld [vmem:[%s5 + $0xd0] sm:$0xf]
    %v1679 = vld [vmem:[%s5 + $0xd4] sm:$0xf]
    %v1680 = vld [vmem:[%s5 + $0xd8] sm:$0xf]
    %v1681 = vld [vmem:[%s5 + $0xdc] sm:$0xf]
    %v1682 = vld [vmem:[%s5 + $0xe0] sm:$0xf]
    %v1683 = vld [vmem:[%s5 + $0xe4] sm:$0xf]
    %v1684 = vld [vmem:[%s5 + $0xe8] sm:$0xf]
    %v1685 = vld [vmem:[%s5 + $0xec] sm:$0xf]
    %v1686 = vld [vmem:[%s5 + $0xf0] sm:$0xf]
    %v1687 = vld [vmem:[%s5 + $0xf4] sm:$0xf]
    %v1688 = vld [vmem:[%s5 + $0xf8] sm:$0xf]
    %v1689 = vld [vmem:[%s5 + $0xfc] sm:$0xf]
    %v1690 = vld [vmem:[%s5 + $0x100] sm:$0xf]
    %v1691 = vld [vmem:[%s5 + $0x104] sm:$0xf]
    %v1692 = vld [vmem:[%s5 + $0x108] sm:$0xf]
    %v1693 = vld [vmem:[%s5 + $0x10c] sm:$0xf]
    %v1694 = vld [vmem:[%s5 + $0x110] sm:$0xf]
    %v1695 = vld [vmem:[%s5 + $0x114] sm:$0xf]
    %v1696 = vld [vmem:[%s5 + $0x118] sm:$0xf]
    %v1697 = vld [vmem:[%s5 + $0x11c] sm:$0xf]
    %v1698 = vld [vmem:[%s5 + $0x120] sm:$0xf]
    %v1699 = vld [vmem:[%s5 + $0x124] sm:$0xf]
    %v1700 = vld [vmem:[%s5 + $0x128] sm:$0xf]
    %v1701 = vld [vmem:[%s5 + $0x12c] sm:$0xf]
    %v1702 = vld [vmem:[%s5 + $0x130] sm:$0xf]
    %v1703 = vld [vmem:[%s5 + $0x134] sm:$0xf]
    %v1704 = vld [vmem:[%s5 + $0x138] sm:$0xf]
    %v1705 = vld [vmem:[%s5 + $0x13c] sm:$0xf]
    %v1706 = vld [vmem:[%s5 + $0x140] sm:$0xf]
    %v1707 = vld [vmem:[%s5 + $0x144] sm:$0xf]
    %v1708 = vld [vmem:[%s5 + $0x148] sm:$0xf]
    %v1709 = vld [vmem:[%s5 + $0x14c] sm:$0xf]
    %v1710 = vld [vmem:[%s5 + $0x150] sm:$0xf]
    %v1711 = vld [vmem:[%s5 + $0x154] sm:$0xf]
    %v1712 = vld [vmem:[%s5 + $0x158] sm:$0xf]
    %v1713 = vld [vmem:[%s5 + $0x15c] sm:$0x3]
    %v1714 = vld [vmem:[%s6] sm:$0x1]
    %v1716 = vlaneseq
    %v1717 = vshrl.u32 %v1716, 7
    %v1718 = vsub.s32 0, %v1717
    %v1719 = vrot.slane %v1714, %v1718
    %v1809 = vunpack.c.l.b16 %v1626
    %v1810 = vunpack.c.l.b16 %v1627
    %v1811 = vunpack.c.l.b16 %v1628
    %v1812 = vunpack.c.l.b16 %v1629
    %v1813 = vunpack.c.l.b16 %v1630
    %v1814 = vunpack.c.l.b16 %v1631
    %v1815 = vunpack.c.l.b16 %v1632
    %v1816 = vunpack.c.l.b16 %v1633
    %v1817 = vunpack.c.l.b16 %v1634
    %v1818 = vunpack.c.l.b16 %v1635
    %v1819 = vunpack.c.l.b16 %v1636
    %v1820 = vunpack.c.l.b16 %v1637
    %v1821 = vunpack.c.l.b16 %v1638
    %v1822 = vunpack.c.l.b16 %v1639
    %v1823 = vunpack.c.l.b16 %v1640
    %v1824 = vunpack.c.l.b16 %v1641
    %v1825 = vunpack.c.l.b16 %v1642
    %v1826 = vunpack.c.l.b16 %v1643
    %v1827 = vunpack.c.l.b16 %v1644
    %v1828 = vunpack.c.l.b16 %v1645
    %v1829 = vunpack.c.l.b16 %v1646
    %v1830 = vunpack.c.l.b16 %v1647
    %v1831 = vunpack.c.l.b16 %v1648
    %v1832 = vunpack.c.l.b16 %v1649
    %v1833 = vunpack.c.l.b16 %v1650
    %v1834 = vunpack.c.l.b16 %v1651
    %v1835 = vunpack.c.l.b16 %v1652
    %v1836 = vunpack.c.l.b16 %v1653
    %v1837 = vunpack.c.l.b16 %v1654
    %v1838 = vunpack.c.l.b16 %v1655
    %v1839 = vunpack.c.l.b16 %v1656
    %v1840 = vunpack.c.l.b16 %v1657
    %v1841 = vunpack.c.l.b16 %v1658
    %v1842 = vunpack.c.l.b16 %v1659
    %v1843 = vunpack.c.l.b16 %v1660
    %v1844 = vunpack.c.l.b16 %v1661
    %v1845 = vunpack.c.l.b16 %v1662
    %v1846 = vunpack.c.l.b16 %v1663
    %v1847 = vunpack.c.l.b16 %v1664
    %v1848 = vunpack.c.l.b16 %v1665
    %v1849 = vunpack.c.l.b16 %v1666
    %v1850 = vunpack.c.l.b16 %v1667
    %v1851 = vunpack.c.l.b16 %v1668
    %v1852 = vunpack.c.l.b16 %v1669
    %v1853 = vunpack.c.l.b16 %v1670
    %v1854 = vunpack.c.l.b16 %v1671
    %v1855 = vunpack.c.l.b16 %v1672
    %v1856 = vunpack.c.l.b16 %v1673
    %v1857 = vunpack.c.l.b16 %v1674
    %v1858 = vunpack.c.l.b16 %v1675
    %v1859 = vunpack.c.l.b16 %v1676
    %v1860 = vunpack.c.l.b16 %v1677
    %v1861 = vunpack.c.l.b16 %v1678
    %v1862 = vunpack.c.l.b16 %v1679
    %v1863 = vunpack.c.l.b16 %v1680
    %v1864 = vunpack.c.l.b16 %v1681
    %v1865 = vunpack.c.l.b16 %v1682
    %v1866 = vunpack.c.l.b16 %v1683
    %v1867 = vunpack.c.l.b16 %v1684
    %v1868 = vunpack.c.l.b16 %v1685
    %v1869 = vunpack.c.l.b16 %v1686
    %v1870 = vunpack.c.l.b16 %v1687
    %v1871 = vunpack.c.l.b16 %v1688
    %v1872 = vunpack.c.l.b16 %v1689
    %v1873 = vunpack.c.l.b16 %v1690
    %v1874 = vunpack.c.l.b16 %v1691
    %v1875 = vunpack.c.l.b16 %v1692
    %v1876 = vunpack.c.l.b16 %v1693
    %v1877 = vunpack.c.l.b16 %v1694
    %v1878 = vunpack.c.l.b16 %v1695
    %v1879 = vunpack.c.l.b16 %v1696
    %v1880 = vunpack.c.l.b16 %v1697
    %v1881 = vunpack.c.l.b16 %v1698
    %v1882 = vunpack.c.l.b16 %v1699
    %v1883 = vunpack.c.l.b16 %v1700
    %v1884 = vunpack.c.l.b16 %v1701
    %v1885 = vunpack.c.l.b16 %v1702
    %v1886 = vunpack.c.l.b16 %v1703
    %v1887 = vunpack.c.l.b16 %v1704
    %v1888 = vunpack.c.l.b16 %v1705
    %v1889 = vunpack.c.l.b16 %v1706
    %v1890 = vunpack.c.l.b16 %v1707
    %v1891 = vunpack.c.l.b16 %v1708
    %v1892 = vunpack.c.l.b16 %v1709
    %v1893 = vunpack.c.l.b16 %v1710
    %v1894 = vunpack.c.l.b16 %v1711
    %v1895 = vunpack.c.l.b16 %v1712
    %v1896 = vunpack.c.l.b16 %v1713
    %v1897 = vpack.c.b16 %v1810, %v1809
    %v1898 = vpack.c.b16 %v1812, %v1811
    %v1899 = vpack.c.b16 %v1814, %v1813
    %v1900 = vpack.c.b16 %v1816, %v1815
    %v1901 = vpack.c.b16 %v1818, %v1817
    %v1902 = vpack.c.b16 %v1820, %v1819
    %v1903 = vpack.c.b16 %v1822, %v1821
    %v1904 = vpack.c.b16 %v1824, %v1823
    %v1905 = vpack.c.b16 %v1826, %v1825
    %v1906 = vpack.c.b16 %v1828, %v1827
    %v1907 = vpack.c.b16 %v1830, %v1829
    %v1908 = vpack.c.b16 %v1832, %v1831
    %v1909 = vpack.c.b16 %v1834, %v1833
    %v1910 = vpack.c.b16 %v1836, %v1835
    %v1911 = vpack.c.b16 %v1838, %v1837
    %v1912 = vpack.c.b16 %v1840, %v1839
    %v1913 = vpack.c.b16 %v1842, %v1841
    %v1914 = vpack.c.b16 %v1844, %v1843
    %v1915 = vpack.c.b16 %v1846, %v1845
    %v1916 = vpack.c.b16 %v1848, %v1847
    %v1917 = vpack.c.b16 %v1850, %v1849
    %v1918 = vpack.c.b16 %v1852, %v1851
    %v1919 = vpack.c.b16 %v1854, %v1853
    %v1920 = vpack.c.b16 %v1856, %v1855
    %v1921 = vpack.c.b16 %v1858, %v1857
    %v1922 = vpack.c.b16 %v1860, %v1859
    %v1923 = vpack.c.b16 %v1862, %v1861
    %v1924 = vpack.c.b16 %v1864, %v1863
    %v1925 = vpack.c.b16 %v1866, %v1865
    %v1926 = vpack.c.b16 %v1868, %v1867
    %v1927 = vpack.c.b16 %v1870, %v1869
    %v1928 = vpack.c.b16 %v1872, %v1871
    %v1929 = vpack.c.b16 %v1874, %v1873
    %v1930 = vpack.c.b16 %v1876, %v1875
    %v1931 = vpack.c.b16 %v1878, %v1877
    %v1932 = vpack.c.b16 %v1880, %v1879
    %v1933 = vpack.c.b16 %v1882, %v1881
    %v1934 = vpack.c.b16 %v1884, %v1883
    %v1935 = vpack.c.b16 %v1886, %v1885
    %v1936 = vpack.c.b16 %v1888, %v1887
    %v1937 = vpack.c.b16 %v1890, %v1889
    %v1938 = vpack.c.b16 %v1892, %v1891
    %v1939 = vpack.c.b16 %v1894, %v1893
    %v1940 = vpack.c.b16 %v1896, %v1895
    %vm1984 = vcmask 490496
    %v1985 = vsel %vm1984, %v1620, 0
    %vm1987 = vcmask 1045504
    %v1989 = vsel %vm1987, %v1940, 0
    %1991 = vmatprep.subr.bf16.mxu0 0
    %1992 = vmatpush1.bf16.msra.mxu0 %v1897
    %1993 = vmatprep.subr.bf16.mxu0 0
    %1994 = vmatpush1.bf16.msra.mxu0 %v1898
    %1995 = vmatprep.subr.bf16.mxu0 0
    %1996 = vmatpush1.bf16.msra.mxu0 %v1899
    %1997 = vmatprep.subr.bf16.mxu0 0
    %1998 = vmatpush1.bf16.msra.mxu0 %v1900
    %1999 = vmatprep.subr.bf16.mxu0 0
    %2000 = vmatpush1.bf16.msra.mxu0 %v1901
    %2001 = vmatprep.subr.bf16.mxu0 0
    %2002 = vmatpush1.bf16.msra.mxu0 %v1902
    %2003 = vmatprep.subr.bf16.mxu0 0
    %2004 = vmatpush1.bf16.msra.mxu0 %v1903
    %2005 = vmatprep.subr.bf16.mxu0 0
    %2006 = vmatpush1.bf16.msra.mxu0 %v1904
    %2007 = vmatprep.subr.bf16.mxu0 0
    %2008 = vmatpush1.bf16.msra.mxu0 %v1905
    %2009 = vmatprep.subr.bf16.mxu0 0
    %2010 = vmatpush1.bf16.msra.mxu0 %v1906
    %2011 = vmatprep.subr.bf16.mxu0 0
    %2012 = vmatpush1.bf16.msra.mxu0 %v1907
    %2013 = vmatprep.subr.bf16.mxu0 0
    %2014 = vmatpush1.bf16.msra.mxu0 %v1908
    %2015 = vmatprep.subr.bf16.mxu0 0
    %2016 = vmatpush1.bf16.msra.mxu0 %v1909
    %2017 = vmatprep.subr.bf16.mxu0 0
    %2018 = vmatpush1.bf16.msra.mxu0 %v1910
    %2019 = vmatprep.subr.bf16.mxu0 0
    %2020 = vmatpush1.bf16.msra.mxu0 %v1911
    %2021 = vmatprep.subr.bf16.mxu0 0
    %2022 = vmatpush1.bf16.msra.mxu0 %v1912
    %2023 = vmatprep.mubr.f32.mxu0 %v1622
    %2024 = vmatmul.mubr.f32.gmra.mrb[0].mxu0 %v1574
    %v2025 = vpop.f32.mrb[0].mxu0
    %v2026 = vadd.f32 %v1719, %v2025
    %v2027 = vpop.f32.mrb[0].mxu0
    %2028 = vdwg.mxu0
    %2029 = vmatprep.subr.bf16.mxu0 0
    %2030 = vmatpush1.bf16.msra.mxu0 %v1913
    %2031 = vmatprep.subr.bf16.mxu0 0
    %2032 = vmatpush1.bf16.msra.mxu0 %v1914
    %2033 = vmatprep.subr.bf16.mxu0 0
    %2034 = vmatpush1.bf16.msra.mxu0 %v1915
    %2035 = vmatprep.subr.bf16.mxu0 0
    %2036 = vmatpush1.bf16.msra.mxu0 %v1916
    %2037 = vmatprep.subr.bf16.mxu0 0
    %2038 = vmatpush1.bf16.msra.mxu0 %v1917
    %2039 = vmatprep.subr.bf16.mxu0 0
    %2040 = vmatpush1.bf16.msra.mxu0 %v1918
    %2041 = vmatprep.subr.bf16.mxu0 0
    %2042 = vmatpush1.bf16.msra.mxu0 %v1919
    %2043 = vmatprep.subr.bf16.mxu0 0
    %2044 = vmatpush1.bf16.msra.mxu0 %v1920
    %2045 = vmatprep.subr.bf16.mxu0 0
    %2046 = vmatpush1.bf16.msra.mxu0 %v1921
    %2047 = vmatprep.subr.bf16.mxu0 0
    %2048 = vmatpush1.bf16.msra.mxu0 %v1922
    %2049 = vmatprep.subr.bf16.mxu0 0
    %2050 = vmatpush1.bf16.msra.mxu0 %v1923
    %2051 = vmatprep.subr.bf16.mxu0 0
    %2052 = vmatpush1.bf16.msra.mxu0 %v1924
    %2053 = vmatprep.subr.bf16.mxu0 0
    %2054 = vmatpush1.bf16.msra.mxu0 %v1925
    %2055 = vmatprep.subr.bf16.mxu0 0
    %2056 = vmatpush1.bf16.msra.mxu0 %v1926
    %2057 = vmatprep.subr.bf16.mxu0 0
    %2058 = vmatpush1.bf16.msra.mxu0 %v1927
    %2059 = vmatprep.subr.bf16.mxu0 0
    %2060 = vmatpush1.bf16.msra.mxu0 %v1928
    %2061 = vmatprep.mubr.f32.mxu0 %v1624
    %2062 = vmatmul.mubr.f32.gmra.mrb[0].mxu0 %v1623
    %v2063 = vpop.f32.mrb[0].mxu0
    %v2064 = vadd.f32 %v2026, %v2063
    %v2065 = vpop.f32.mrb[0].mxu0
    %2066 = vdwg.mxu0
    %2067 = vmatprep.subr.bf16.mxu0 0
    %2068 = vmatpush1.bf16.msra.mxu0 %v1929
    %2069 = vmatprep.subr.bf16.mxu0 0
    %2070 = vmatpush1.bf16.msra.mxu0 %v1930
    %2071 = vmatprep.subr.bf16.mxu0 0
    %2072 = vmatpush1.bf16.msra.mxu0 %v1931
    %2073 = vmatprep.subr.bf16.mxu0 0
    %2074 = vmatpush1.bf16.msra.mxu0 %v1932
    %2075 = vmatprep.subr.bf16.mxu0 0
    %2076 = vmatpush1.bf16.msra.mxu0 %v1933
    %2077 = vmatprep.subr.bf16.mxu0 0
    %2078 = vmatpush1.bf16.msra.mxu0 %v1934
    %2079 = vmatprep.subr.bf16.mxu0 0
    %2080 = vmatpush1.bf16.msra.mxu0 %v1935
    %2081 = vmatprep.subr.bf16.mxu0 0
    %2082 = vmatpush1.bf16.msra.mxu0 %v1936
    %2083 = vmatprep.subr.bf16.mxu0 0
    %2084 = vmatpush1.bf16.msra.mxu0 %v1937
    %2085 = vmatprep.subr.bf16.mxu0 0
    %2086 = vmatpush1.bf16.msra.mxu0 %v1938
    %2087 = vmatprep.subr.bf16.mxu0 0
    %2088 = vmatpush1.bf16.msra.mxu0 %v1939
    %2089 = vmatprep.subr.bf16.mxu0 0
    %2090 = vmatpush1.bf16.msra.mxu0 %v1989
    %2091 = vmatprep.subr.bf16.mxu0 0
    %2092 = vmatpush1.bf16.msra.mxu0 0
    %2093 = vmatprep.subr.bf16.mxu0 0
    %2094 = vmatpush1.bf16.msra.mxu0 0
    %2095 = vmatprep.subr.bf16.mxu0 0
    %2096 = vmatpush1.bf16.msra.mxu0 0
    %2097 = vmatprep.subr.bf16.mxu0 0
    %2098 = vmatpush1.bf16.msra.mxu0 0
    %2099 = vmatprep.mubr.f32.mxu0 %v1985
    %2100 = vmatmul.mubr.f32.gmra.mrb[0].mxu0 %v1625
    %v2101 = vpop.f32.mrb[0].mxu0
    %v2102 = vadd.f32 %v2064, %v2101
    %v2103 = vpop.f32.mrb[0].mxu0
    %2104 = vdwg.mxu0
    %v2105 = vtanh.pop %v2102
    %v2106 = vld [vmem:[%s7] sm:$0xf]
    %v2107 = vld [vmem:[%s7 + $0x4] sm:$0xf]
    %v2108 = vld [vmem:[%s7 + $0x8] sm:$0xf]
    %v2109 = vld [vmem:[%s7 + $0xc] sm:$0xf]
    %v2110 = vld [vmem:[%s7 + $0x10] sm:$0xf]
    %v2111 = vld [vmem:[%s7 + $0x14] sm:$0xf]
    %v2112 = vld [vmem:[%s7 + $0x18] sm:$0xf]
    %v2113 = vld [vmem:[%s7 + $0x1c] sm:$0xf]
    %v2114 = vld [vmem:[%s7 + $0x20] sm:$0xf]
    %v2115 = vld [vmem:[%s7 + $0x24] sm:$0xf]
    %v2116 = vld [vmem:[%s7 + $0x28] sm:$0xf]
    %v2117 = vld [vmem:[%s7 + $0x2c] sm:$0xf]
    %v2118 = vld [vmem:[%s7 + $0x30] sm:$0xf]
    %v2119 = vld [vmem:[%s7 + $0x34] sm:$0xf]
    %v2120 = vld [vmem:[%s7 + $0x38] sm:$0xf]
    %v2121 = vld [vmem:[%s8] sm:$0x1]
    %v2123 = vlaneseq
    %v2124 = vshrl.u32 %v2123, 7
    %v2125 = vsub.s32 0, %v2124
    %v2126 = vrot.slane %v2121, %v2125
    %v2143 = vunpack.c.l.b16 %v2106
    %v2144 = vunpack.c.l.b16 %v2107
    %v2145 = vunpack.c.l.b16 %v2108
    %v2146 = vunpack.c.l.b16 %v2109
    %v2147 = vunpack.c.l.b16 %v2110
    %v2148 = vunpack.c.l.b16 %v2111
    %v2149 = vunpack.c.l.b16 %v2112
    %v2150 = vunpack.c.l.b16 %v2113
    %v2151 = vunpack.c.l.b16 %v2114
    %v2152 = vunpack.c.l.b16 %v2115
    %v2153 = vunpack.c.l.b16 %v2116
    %v2154 = vunpack.c.l.b16 %v2117
    %v2155 = vunpack.c.l.b16 %v2118
    %v2156 = vunpack.c.l.b16 %v2119
    %v2157 = vunpack.c.l.b16 %v2120
    %v2158 = vpack.c.b16 %v2144, %v2143
    %v2159 = vpack.c.b16 %v2146, %v2145
    %v2160 = vpack.c.b16 %v2148, %v2147
    %v2161 = vpack.c.b16 %v2150, %v2149
    %v2162 = vpack.c.b16 %v2152, %v2151
    %v2163 = vpack.c.b16 %v2154, %v2153
    %v2164 = vpack.c.b16 %v2156, %v2155
    %v2165 = vpack.c.b16 %v2157, %v2157
    %vm2173 = vcmask 982016
    %v2175 = vsel %vm2173, %v2105, 0
    %vm2177 = vcmask 1043456
    %v2179 = vsel %vm2177, %v2165, 0
    %2181 = vmatprep.subr.bf16.mxu0 0
    %2182 = vmatpush1.bf16.msra.mxu0 %v2158
    %2183 = vmatprep.subr.bf16.mxu0 0
    %2184 = vmatpush1.bf16.msra.mxu0 %v2159
    %2185 = vmatprep.subr.bf16.mxu0 0
    %2186 = vmatpush1.bf16.msra.mxu0 %v2160
    %2187 = vmatprep.subr.bf16.mxu0 0
    %2188 = vmatpush1.bf16.msra.mxu0 %v2161
    %2189 = vmatprep.subr.bf16.mxu0 0
    %2190 = vmatpush1.bf16.msra.mxu0 %v2162
    %2191 = vmatprep.subr.bf16.mxu0 0
    %2192 = vmatpush1.bf16.msra.mxu0 %v2163
    %2193 = vmatprep.subr.bf16.mxu0 0
    %2194 = vmatpush1.bf16.msra.mxu0 %v2164
    %2195 = vmatprep.subr.bf16.mxu0 0
    %2196 = vmatpush1.bf16.msra.mxu0 %v2179
    %2197 = vmatprep.subr.bf16.mxu0 0
    %2198 = vmatpush1.bf16.msra.mxu0 0
    %2199 = vmatprep.subr.bf16.mxu0 0
    %2200 = vmatpush1.bf16.msra.mxu0 0
    %2201 = vmatprep.subr.bf16.mxu0 0
    %2202 = vmatpush1.bf16.msra.mxu0 0
    %2203 = vmatprep.subr.bf16.mxu0 0
    %2204 = vmatpush1.bf16.msra.mxu0 0
    %2205 = vmatprep.subr.bf16.mxu0 0
    %2206 = vmatpush1.bf16.msra.mxu0 0
    %2207 = vmatprep.subr.bf16.mxu0 0
    %2208 = vmatpush1.bf16.msra.mxu0 0
    %2209 = vmatprep.subr.bf16.mxu0 0
    %2210 = vmatpush1.bf16.msra.mxu0 0
    %2211 = vmatprep.subr.bf16.mxu0 0
    %2212 = vmatpush1.bf16.msra.mxu0 0
    %2213 = vmatprep.mubr.f32.mxu0 0.0
    %2214 = vmatmul.mubr.f32.gmra.mrb[0].mxu0 %v2175
    %v2215 = vpop.f32.mrb[0].mxu0
    %v2216 = vadd.f32 %v2126, %v2215
    %v2217 = vpop.f32.mrb[0].mxu0
    %2218 = vdwg.mxu0
    %v2219 = vtanh.pop %v2216
    %v2220 = vld [vmem:[%s9] sm:$0xf]
    %v2221 = vld [vmem:[%s9 + $0x4] sm:$0xf]
    %v2222 = vld [vmem:[%s9 + $0x8] sm:$0xf]
    %v2223 = vld [vmem:[%s9 + $0xc] sm:$0xf]
    %v2224 = vld [vmem:[%s9 + $0x10] sm:$0xf]
    %v2225 = vld [vmem:[%s9 + $0x14] sm:$0xf]
    %v2226 = vld [vmem:[%s9 + $0x18] sm:$0xf]
    %v2227 = vld [vmem:[%s9 + $0x1c] sm:$0xf]
    %v2228 = vld [vmem:[%s9 + $0x20] sm:$0xf]
    %v2229 = vld [vmem:[%s9 + $0x24] sm:$0xf]
    %v2230 = vld [vmem:[%s9 + $0x28] sm:$0x3]
    %v2231 = vld [vmem:[%s10] sm:$0x1]
    %v2233 = vlaneseq
    %v2234 = vshrl.u32 %v2233, 7
    %v2235 = vsub.s32 0, %v2234
    %v2236 = vrot.slane %v2231, %v2235
    %v2249 = vunpack.c.l.b16 %v2220
    %v2250 = vunpack.c.l.b16 %v2221
    %v2251 = vunpack.c.l.b16 %v2222
    %v2252 = vunpack.c.l.b16 %v2223
    %v2253 = vunpack.c.l.b16 %v2224
    %v2254 = vunpack.c.l.b16 %v2225
    %v2255 = vunpack.c.l.b16 %v2226
    %v2256 = vunpack.c.l.b16 %v2227
    %v2257 = vunpack.c.l.b16 %v2228
    %v2258 = vunpack.c.l.b16 %v2229
    %v2259 = vunpack.c.l.b16 %v2230
    %v2260 = vpack.c.b16 %v2250, %v2249
    %v2261 = vpack.c.b16 %v2252, %v2251
    %v2262 = vpack.c.b16 %v2254, %v2253
    %v2263 = vpack.c.b16 %v2256, %v2255
    %v2264 = vpack.c.b16 %v2258, %v2257
    %v2265 = vpack.c.b16 %v2259, %v2259
    %v2272 = vsel %vm966, %v2219, 0
    %v2275 = vsel %vm1361, %v2265, 0
    %2277 = vmatprep.subr.bf16.mxu0 0
    %2278 = vmatpush1.bf16.msra.mxu0 %v2260
    %2279 = vmatprep.subr.bf16.mxu0 0
    %2280 = vmatpush1.bf16.msra.mxu0 %v2261
    %2281 = vmatprep.subr.bf16.mxu0 0
    %2282 = vmatpush1.bf16.msra.mxu0 %v2262
    %2283 = vmatprep.subr.bf16.mxu0 0
    %2284 = vmatpush1.bf16.msra.mxu0 %v2263
    %2285 = vmatprep.subr.bf16.mxu0 0
    %2286 = vmatpush1.bf16.msra.mxu0 %v2264
    %2287 = vmatprep.subr.bf16.mxu0 0
    %2288 = vmatpush1.bf16.msra.mxu0 %v2275
    %2289 = vmatprep.subr.bf16.mxu0 0
    %2290 = vmatpush1.bf16.msra.mxu0 0
    %2291 = vmatprep.subr.bf16.mxu0 0
    %2292 = vmatpush1.bf16.msra.mxu0 0
    %2293 = vmatprep.subr.bf16.mxu0 0
    %2294 = vmatpush1.bf16.msra.mxu0 0
    %2295 = vmatprep.subr.bf16.mxu0 0
    %2296 = vmatpush1.bf16.msra.mxu0 0
    %2297 = vmatprep.subr.bf16.mxu0 0
    %2298 = vmatpush1.bf16.msra.mxu0 0
    %2299 = vmatprep.subr.bf16.mxu0 0
    %2300 = vmatpush1.bf16.msra.mxu0 0
    %2301 = vmatprep.subr.bf16.mxu0 0
    %2302 = vmatpush1.bf16.msra.mxu0 0
    %2303 = vmatprep.subr.bf16.mxu0 0
    %2304 = vmatpush1.bf16.msra.mxu0 0
    %2305 = vmatprep.subr.bf16.mxu0 0
    %2306 = vmatpush1.bf16.msra.mxu0 0
    %2307 = vmatprep.subr.bf16.mxu0 0
    %2308 = vmatpush1.bf16.msra.mxu0 0
    %2309 = vmatprep.mubr.f32.mxu0 0.0
    %2310 = vmatmul.mubr.f32.gmra.mrb[0].mxu0 %v2272
    %v2311 = vpop.f32.mrb[0].mxu0
    %v2312 = vadd.f32 %v2236, %v2311
    %v2313 = vpop.f32.mrb[0].mxu0
    %2314 = vdwg.mxu0
    %vm2315 = vcmask 80896
    %v2316 = vsel %vm2315, %v2312, -inf
    %2317 = vmax.xlane.f32.xlu0 %v2316
    %v2318 = vpop.xlane.xlu0 %2317
    %v2319 = vsub.f32 %v2312, %v2318
    %v2320 = vmul.f32 %v2319, 1.442695
    %v2321 = vpow.pop %v2320
    %v2322 = vsel %vm2315, %v2321, 0.0
    %2323 = vadd.xlane.f32.xlu0 %v2322
    %v2324 = vpop.xlane.xlu0 %2323
    %v2325 = vrcp.pop %v2324
    %v2326 = vmul.f32 %v2324, %v2325
    %v2327 = vsub.f32 2.0, %v2326
    %v2328 = vmul.f32 %v2325, %v2327
    %v2329 = vmul.f32 %v2321, %v2328
    %2330 = vst.msk [vmem:[#allocation2] sm:$0xff] %vm2315, %v2329
    // Predicated region
    $region46: #{tpu_custom_call.1} parent=1 // pred_check
      _
    $region47: #{tpu_custom_call.1} parent=1 // pred_check_branch
      %2332 = sbr.rel (0) target = $region49
    $region48: #{tpu_custom_call.1} parent=1 // pred_region
      %s2334 = ssub.s32 128, 128
      %2335 = vsyncadd [#allocation3], %s2334
      %s2337 = sshll.u32 [#allocation2], 4
      %s2338 = int_to_ptr.vmem [resolvable:$true] %s2337
      %2340 = dma.vmem_to_hbm [thread:$0]  %s2338, 128, %s11, [#allocation3]
    $region49: #{tpu_custom_call.1} parent=1 // pred_fallthru
      _
    // Predicated region
    $region50: #{tpu_custom_call.1} parent=1 // pred_check
      _
    $region51: #{tpu_custom_call.1} parent=1 // pred_check_branch
      %2342 = sbr.rel (0) target = $region53
    $region52: #{tpu_custom_call.1} parent=1 // pred_region
      %2343 = dma.done [#allocation3], 128
    $region53: #{tpu_custom_call.1} parent=1 // pred_fallthru
      _
    %2344 = vsyncpa [#allocation3], 1

</llo_original>
